<compile_context>
chip_gen: v6e
topology: v6e:2x2x1
jax: 0.10.0
libtpu: 0.0.40
codegen_flags: <defaults>
</compile_context>

<pallas_src>
import functools
import numpy as np
import jax
import jax.numpy as jnp
from jax import lax
from jax.experimental import pallas as pl
from jax.experimental.pallas import tpu as pltpu


# ----------------------------------------------------------------------------
# Fused kernel: conv3x3 + bias + GroupNorm + (scale,shift) + SiLU
# One grid step == one batch element; everything stays lane-dense (H*W lanes).
# ----------------------------------------------------------------------------
def _block_kernel(x_ref, w_ref, b_ref, gamma_ref, beta_ref, scale_ref,
                  shift_ref, o_ref, *, H, W, groups, gn_eps):
    HW = H * W
    Cout = o_ref.shape[1]

    # (Cin, HW + 2*(W+1)) flat spatial row with a zero halo of W+1 on each side
    # (handles the H-direction border of the 3x3 conv; W border handled below).
    xp = x_ref[0].astype(jnp.float32)

    # W-boundary validity masks for the flattened spatial axis (kills the
    # wrap-around columns that the flat shift would otherwise pull in).
    w_pos = lax.broadcasted_iota(jnp.int32, (1, HW), 1) % W
    left_ok = w_pos >= 1          # tap kw=0 reads column w-1
    right_ok = w_pos <= W - 2     # tap kw=2 reads column w+1

    # 3x3 conv: 9 taps, each (Cout, Cin) x (Cin, HW) on the MXU with the
    # spatial axis (256) on the lane/N axis; accumulate in f32.
    acc = jnp.zeros((Cout, HW), jnp.float32)
    for kh in range(3):
        for kw in range(3):
            off = kh * W + kw
            tap = xp[:, off:off + HW]                     # static lane-shift slice
            if kw == 0:
                tap = jnp.where(left_ok, tap, 0.0)
            elif kw == 2:
                tap = jnp.where(right_ok, tap, 0.0)
            acc = acc + jnp.dot(w_ref[kh * 3 + kw].astype(jnp.float32), tap,
                                preferred_element_type=jnp.float32)
    acc = acc + b_ref[...].astype(jnp.float32)            # (Cout, 1) broadcast

    # GroupNorm over (spatial x channels-in-group), two-pass (mean first, then
    # centered sum of squares) to avoid E[x^2]-E[x]^2 cancellation.
    cpg = Cout // groups
    cnt = jnp.float32(HW * cpg)
    sum_c = jnp.sum(acc, axis=1, keepdims=True)                              # (Cout,1)
    mean_g = jnp.sum(sum_c.reshape(groups, cpg), axis=1, keepdims=True) / cnt
    mean_c = jnp.broadcast_to(mean_g, (groups, cpg)).reshape(Cout, 1)
    cen = acc - mean_c
    ssq_c = jnp.sum(cen * cen, axis=1, keepdims=True)                        # (Cout,1)
    var_g = jnp.sum(ssq_c.reshape(groups, cpg), axis=1, keepdims=True) / cnt
    inv_c = jnp.broadcast_to(lax.rsqrt(var_g + gn_eps), (groups, cpg)).reshape(Cout, 1)

    y = cen * inv_c
    y = y * gamma_ref[...].astype(jnp.float32) + beta_ref[...].astype(jnp.float32)
    # optional FiLM-style modulation: x * (scale + 1) + shift (zeros => identity)
    y = y * (scale_ref[0].astype(jnp.float32) + 1.0) + shift_ref[0].astype(jnp.float32)
    # SiLU
    y = y * jax.nn.sigmoid(y)

    o_ref[0] = y.astype(o_ref.dtype)                      # lane-dense (Cout, HW) store


# ----------------------------------------------------------------------------
# Wrapper (NCHW in / NCHW out, like the PyTorch module)
# ----------------------------------------------------------------------------
def block_forward(x_nchw, params, scale_shift=None, groups=8):
    w, b, gamma, beta = params["w"], params["b"], params["gamma"], params["beta"]
    N, Cin, H, W = x_nchw.shape
    Cout = w.shape[0]
    HW = H * W
    HWp = HW + 2 * (W + 1)

    # Weight standardization (tiny: Cout*Cin*9 elems) in plain XLA.
    # eps is chosen from the *activation* dtype, exactly like the PyTorch module.
    ws_eps = 1e-5 if x_nchw.dtype == jnp.float32 else 1e-3
    w32 = w.astype(jnp.float32)
    w_mean = jnp.mean(w32, axis=(1, 2, 3), keepdims=True)
    w_var = jnp.mean((w32 - w_mean) ** 2, axis=(1, 2, 3), keepdims=True)  # unbiased=False
    # NOTE: matches the reference module verbatim: (w - mean) / rsqrt(var + eps)
    w_std = (w32 - w_mean) / lax.rsqrt(w_var + ws_eps)
    # (Cout, Cin, 3, 3) -> (tap=kh*3+kw, Cout, Cin) for per-tap MXU matmuls.
    w_taps = jnp.transpose(w_std, (2, 3, 0, 1)).reshape(9, Cout, Cin)

    # Flat, lane-dense input layout: NCHW -> (N, Cin, H*W) is a free reshape.
    x_flat = x_nchw.reshape(N, Cin, HW)
    # 1-D halo of W+1 zeros on each side (H-direction conv border).
    # TODO(synk): fuse this small halo pad into the kernel (VMEM scratch store)
    # to drop the one remaining extra HBM pass over the input.
    x_pad = jnp.pad(x_flat, ((0, 0), (0, 0), (W + 1, W + 1)))

    if scale_shift is None:
        scale = jnp.zeros((N, Cout, 1), jnp.float32)
        shift = jnp.zeros((N, Cout, 1), jnp.float32)
    else:
        s, t = scale_shift                                  # each (N, Cout, 1, 1)
        scale = s.reshape(N, Cout, 1).astype(jnp.float32)
        shift = t.reshape(N, Cout, 1).astype(jnp.float32)

    # TODO(synk): for large spatial shapes (v7x 64 MiB VMEM / 2 TCs) add an
    # H-tile grid axis with halo + cross-tile GroupNorm stats, and optionally
    # cast the matmul operands to bf16 (kept f32 here for strict parity at
    # these tiny K/Cin sizes).
    kernel = functools.partial(_block_kernel, H=H, W=W, groups=groups, gn_eps=1e-5)
    out = pl.pallas_call(
        kernel,
        out_shape=jax.ShapeDtypeStruct((N, Cout, HW), x_nchw.dtype),
        grid=(N,),
        in_specs=[
            pl.BlockSpec((1, Cin, HWp), lambda n: (n, 0, 0)),     # padded flat input
            pl.BlockSpec((9, Cout, Cin), lambda n: (0, 0, 0)),    # per-tap weights
            pl.BlockSpec((Cout, 1), lambda n: (0, 0)),            # bias
            pl.BlockSpec((Cout, 1), lambda n: (0, 0)),            # gamma
            pl.BlockSpec((Cout, 1), lambda n: (0, 0)),            # beta
            pl.BlockSpec((1, Cout, 1), lambda n: (n, 0, 0)),      # FiLM scale
            pl.BlockSpec((1, Cout, 1), lambda n: (n, 0, 0)),      # FiLM shift
        ],
        out_specs=pl.BlockSpec((1, Cout, HW), lambda n: (n, 0, 0)),
        compiler_params=pltpu.CompilerParams(dimension_semantics=("parallel",)),
    )(x_pad, w_taps,
      b.reshape(Cout, 1).astype(jnp.float32),
      gamma.reshape(Cout, 1).astype(jnp.float32),
      beta.reshape(Cout, 1).astype(jnp.float32),
      scale, shift)

    return out.reshape(N, Cout, H, W)                       # free reshape -> NCHW


# ----------------------------------------------------------------------------
# Pure-JAX reference (mirrors the PyTorch forward exactly) for validation
# ----------------------------------------------------------------------------
def block_reference(x, params, scale_shift=None, groups=8):
    w, b, gamma, beta = params["w"], params["b"], params["gamma"], params["beta"]
    eps = 1e-5 if x.dtype == jnp.float32 else 1e-3
    mean = jnp.mean(w, axis=(1, 2, 3), keepdims=True)
    var = jnp.mean((w - mean) ** 2, axis=(1, 2, 3), keepdims=True)
    w_n = (w - mean) / lax.rsqrt(var + eps)
    y = lax.conv_general_dilated(x, w_n, (1, 1), "SAME",
                                 dimension_numbers=("NCHW", "OIHW", "NCHW"))
    y = y + b.reshape(1, -1, 1, 1)
    N, C, H, W = y.shape
    yg = y.reshape(N, groups, C // groups, H, W)
    m = jnp.mean(yg, axis=(2, 3, 4), keepdims=True)
    v = jnp.mean((yg - m) ** 2, axis=(2, 3, 4), keepdims=True)
    y = ((yg - m) * lax.rsqrt(v + 1e-5)).reshape(N, C, H, W)
    y = y * gamma.reshape(1, -1, 1, 1) + beta.reshape(1, -1, 1, 1)
    if scale_shift is not None:
        s, t = scale_shift
        y = y * (s + 1.0) + t
    return y * jax.nn.sigmoid(y)


if __name__ == "__main__":
    # Block(dim=4, dim_out=8, groups=8); small deterministic problem.
    N, Cin, H, W = 2, 4, 16, 16
    Cout, groups = 8, 8

    key = jax.random.PRNGKey(0)
    kx, kw, kb, ks, kt = jax.random.split(key, 5)
    x = jax.random.normal(kx, (N, Cin, H, W), jnp.float32)
    params = {
        "w": jax.random.normal(kw, (Cout, Cin, 3, 3), jnp.float32) * 0.1,
        "b": jax.random.normal(kb, (Cout,), jnp.float32) * 0.1,
        "gamma": jnp.ones((Cout,), jnp.float32),    # nn.GroupNorm default init
        "beta": jnp.zeros((Cout,), jnp.float32),
    }
    scale_shift = (jax.random.normal(ks, (N, Cout, 1, 1), jnp.float32) * 0.1,
                   jax.random.normal(kt, (N, Cout, 1, 1), jnp.float32) * 0.1)

    # With FiLM scale/shift
    out = block_forward(x, params, scale_shift=scale_shift, groups=groups)
    out = jax.block_until_ready(out)
    ref = block_reference(x, params, scale_shift=scale_shift, groups=groups)
    assert out.shape == (N, Cout, H, W)
    assert np.allclose(np.asarray(out), np.asarray(ref), rtol=1e-3, atol=1e-3)

    # Without FiLM scale/shift
    out2 = jax.block_until_ready(block_forward(x, params, scale_shift=None, groups=groups))
    ref2 = block_reference(x, params, scale_shift=None, groups=groups)
    assert np.allclose(np.asarray(out2), np.asarray(ref2), rtol=1e-3, atol=1e-3)

    print("KERNEL_OK")
</pallas_src>

<mosaic_0001>
module attributes {stable_mosaic.version = 11 : i64} {
  func.func @_block_kernel(%arg0: i32, %arg1: memref<1x4x290xf32, #tpu.memory_space<vmem>>, %arg2: memref<9x8x4xf32, #tpu.memory_space<vmem>>, %arg3: memref<8x1xf32, #tpu.memory_space<vmem>>, %arg4: memref<8x1xf32, #tpu.memory_space<vmem>>, %arg5: memref<8x1xf32, #tpu.memory_space<vmem>>, %arg6: memref<1x8x1xf32, #tpu.memory_space<vmem>>, %arg7: memref<1x8x1xf32, #tpu.memory_space<vmem>>, %arg8: memref<1x8x256xf32, #tpu.memory_space<vmem>>) attributes {dimension_semantics = [#tpu.dimension_semantics<parallel>], iteration_bounds = array<i64: 2>, scalar_prefetch = 0 : i64, scratch_operands = 0 : i64, tpu.core_type = #tpu.core_type<tc>, window_params = [{transform_indices = @transform_0, window_bounds = array<i64: 1, 4, 290>}, {pipeline_mode = #tpu.pipeline_mode<synchronous>, transform_indices = @transform_1, window_bounds = array<i64: 9, 8, 4>}, {pipeline_mode = #tpu.pipeline_mode<synchronous>, transform_indices = @transform_2, window_bounds = array<i64: 8, 1>}, {pipeline_mode = #tpu.pipeline_mode<synchronous>, transform_indices = @transform_3, window_bounds = array<i64: 8, 1>}, {pipeline_mode = #tpu.pipeline_mode<synchronous>, transform_indices = @transform_4, window_bounds = array<i64: 8, 1>}, {transform_indices = @transform_5, window_bounds = array<i64: 1, 8, 1>}, {transform_indices = @transform_6, window_bounds = array<i64: 1, 8, 1>}, {transform_indices = @transform_7, window_bounds = array<i64: 1, 8, 256>}]} {
    %c0 = arith.constant 0 : index
    %c0_0 = arith.constant 0 : index
    %c0_1 = arith.constant 0 : index
    %0 = vector.load %arg1[%c0, %c0_0, %c0_1] : memref<1x4x290xf32, #tpu.memory_space<vmem>>, vector<1x4x290xf32>
    %1 = vector.shape_cast %0 : vector<1x4x290xf32> to vector<4x290xf32>
    %2 = tpu.iota {dimensions = array<i32: 1>} : vector<1x256xi32>
    %c16_i32 = arith.constant 16 : i32
    %c0_i32 = arith.constant 0 : i32
    %3 = arith.cmpi eq, %c16_i32, %c0_i32 : i32
    %c1_i32 = arith.constant 1 : i32
    %4 = arith.select %3, %c1_i32, %c16_i32 : i32
    %5 = vector.broadcast %4 : i32 to vector<1x256xi32>
    %6 = arith.remsi %2, %5 : vector<1x256xi32>
    %c0_i32_2 = arith.constant 0 : i32
    %7 = vector.broadcast %c0_i32_2 : i32 to vector<1x256xi32>
    %8 = arith.cmpi ne, %6, %7 : vector<1x256xi32>
    %c0_i32_3 = arith.constant 0 : i32
    %9 = vector.broadcast %c0_i32_3 : i32 to vector<1x256xi32>
    %10 = arith.cmpi slt, %6, %9 : vector<1x256xi32>
    %c0_i32_4 = arith.constant 0 : i32
    %11 = arith.cmpi slt, %4, %c0_i32_4 : i32
    %12 = vector.broadcast %11 : i1 to vector<1x256xi1>
    %13 = vector.broadcast %12 : vector<1x256xi1> to vector<1x256xi1>
    %14 = arith.xori %10, %13 : vector<1x256xi1>
    %15 = arith.andi %14, %8 : vector<1x256xi1>
    %16 = vector.broadcast %4 : i32 to vector<1x256xi32>
    %17 = arith.addi %6, %16 : vector<1x256xi32>
    %18 = arith.select %15, %17, %6 : vector<1x256xi1>, vector<1x256xi32>
    %c1_i32_5 = arith.constant 1 : i32
    %19 = vector.broadcast %c1_i32_5 : i32 to vector<1x256xi32>
    %20 = arith.cmpi sge, %18, %19 : vector<1x256xi32>
    %c14_i32 = arith.constant 14 : i32
    %21 = vector.broadcast %c14_i32 : i32 to vector<1x256xi32>
    %22 = arith.cmpi sle, %18, %21 : vector<1x256xi32>
    %cst = arith.constant 0.000000e+00 : f32
    %23 = vector.broadcast %cst : f32 to vector<8x256xf32>
    %24 = vector.extract_strided_slice %1 {offsets = [0, 0], sizes = [4, 256], strides = [1, 1]} : vector<4x290xf32> to vector<4x256xf32>
    %cst_6 = arith.constant 0.000000e+00 : f32
    %25 = vector.shape_cast %20 : vector<1x256xi1> to vector<1x256xi1>
    %26 = vector.broadcast %25 : vector<1x256xi1> to vector<4x256xi1>
    %27 = vector.broadcast %cst_6 : f32 to vector<4x256xf32>
    %28 = arith.select %26, %24, %27 : vector<4x256xi1>, vector<4x256xf32>
    %c0_7 = arith.constant 0 : index
    %c0_8 = arith.constant 0 : index
    %c0_9 = arith.constant 0 : index
    %29 = vector.load %arg2[%c0_7, %c0_8, %c0_9] : memref<9x8x4xf32, #tpu.memory_space<vmem>>, vector<1x8x4xf32>
    %30 = vector.shape_cast %29 : vector<1x8x4xf32> to vector<8x4xf32>
    %cst_10 = arith.constant dense<0.000000e+00> : vector<8x256xf32>
    %31 = tpu.matmul %30, %28, %cst_10 {dimension_numbers = #tpu.dot_dimension_numbers<[1], [0], [0], [1], [0, 0, 1, 1], [], []>} : vector<8x4xf32>, vector<4x256xf32>, vector<8x256xf32> -> vector<8x256xf32>
    %32 = arith.addf %23, %31 : vector<8x256xf32>
    %33 = vector.extract_strided_slice %1 {offsets = [0, 1], sizes = [4, 256], strides = [1, 1]} : vector<4x290xf32> to vector<4x256xf32>
    %c1 = arith.constant 1 : index
    %c0_11 = arith.constant 0 : index
    %c0_12 = arith.constant 0 : index
    %34 = vector.load %arg2[%c1, %c0_11, %c0_12] : memref<9x8x4xf32, #tpu.memory_space<vmem>>, vector<1x8x4xf32>
    %35 = vector.shape_cast %34 : vector<1x8x4xf32> to vector<8x4xf32>
    %cst_13 = arith.constant dense<0.000000e+00> : vector<8x256xf32>
    %36 = tpu.matmul %35, %33, %cst_13 {dimension_numbers = #tpu.dot_dimension_numbers<[1], [0], [0], [1], [0, 0, 1, 1], [], []>} : vector<8x4xf32>, vector<4x256xf32>, vector<8x256xf32> -> vector<8x256xf32>
    %37 = arith.addf %32, %36 : vector<8x256xf32>
    %38 = vector.extract_strided_slice %1 {offsets = [0, 2], sizes = [4, 256], strides = [1, 1]} : vector<4x290xf32> to vector<4x256xf32>
    %cst_14 = arith.constant 0.000000e+00 : f32
    %39 = vector.shape_cast %22 : vector<1x256xi1> to vector<1x256xi1>
    %40 = vector.broadcast %39 : vector<1x256xi1> to vector<4x256xi1>
    %41 = vector.broadcast %cst_14 : f32 to vector<4x256xf32>
    %42 = arith.select %40, %38, %41 : vector<4x256xi1>, vector<4x256xf32>
    %c2 = arith.constant 2 : index
    %c0_15 = arith.constant 0 : index
    %c0_16 = arith.constant 0 : index
    %43 = vector.load %arg2[%c2, %c0_15, %c0_16] : memref<9x8x4xf32, #tpu.memory_space<vmem>>, vector<1x8x4xf32>
    %44 = vector.shape_cast %43 : vector<1x8x4xf32> to vector<8x4xf32>
    %cst_17 = arith.constant dense<0.000000e+00> : vector<8x256xf32>
    %45 = tpu.matmul %44, %42, %cst_17 {dimension_numbers = #tpu.dot_dimension_numbers<[1], [0], [0], [1], [0, 0, 1, 1], [], []>} : vector<8x4xf32>, vector<4x256xf32>, vector<8x256xf32> -> vector<8x256xf32>
    %46 = arith.addf %37, %45 : vector<8x256xf32>
    %47 = vector.extract_strided_slice %1 {offsets = [0, 16], sizes = [4, 256], strides = [1, 1]} : vector<4x290xf32> to vector<4x256xf32>
    %cst_18 = arith.constant 0.000000e+00 : f32
    %48 = vector.shape_cast %20 : vector<1x256xi1> to vector<1x256xi1>
    %49 = vector.broadcast %48 : vector<1x256xi1> to vector<4x256xi1>
    %50 = vector.broadcast %cst_18 : f32 to vector<4x256xf32>
    %51 = arith.select %49, %47, %50 : vector<4x256xi1>, vector<4x256xf32>
    %c3 = arith.constant 3 : index
    %c0_19 = arith.constant 0 : index
    %c0_20 = arith.constant 0 : index
    %52 = vector.load %arg2[%c3, %c0_19, %c0_20] : memref<9x8x4xf32, #tpu.memory_space<vmem>>, vector<1x8x4xf32>
    %53 = vector.shape_cast %52 : vector<1x8x4xf32> to vector<8x4xf32>
    %cst_21 = arith.constant dense<0.000000e+00> : vector<8x256xf32>
    %54 = tpu.matmul %53, %51, %cst_21 {dimension_numbers = #tpu.dot_dimension_numbers<[1], [0], [0], [1], [0, 0, 1, 1], [], []>} : vector<8x4xf32>, vector<4x256xf32>, vector<8x256xf32> -> vector<8x256xf32>
    %55 = arith.addf %46, %54 : vector<8x256xf32>
    %56 = vector.extract_strided_slice %1 {offsets = [0, 17], sizes = [4, 256], strides = [1, 1]} : vector<4x290xf32> to vector<4x256xf32>
    %c4 = arith.constant 4 : index
    %c0_22 = arith.constant 0 : index
    %c0_23 = arith.constant 0 : index
    %57 = vector.load %arg2[%c4, %c0_22, %c0_23] : memref<9x8x4xf32, #tpu.memory_space<vmem>>, vector<1x8x4xf32>
    %58 = vector.shape_cast %57 : vector<1x8x4xf32> to vector<8x4xf32>
    %cst_24 = arith.constant dense<0.000000e+00> : vector<8x256xf32>
    %59 = tpu.matmul %58, %56, %cst_24 {dimension_numbers = #tpu.dot_dimension_numbers<[1], [0], [0], [1], [0, 0, 1, 1], [], []>} : vector<8x4xf32>, vector<4x256xf32>, vector<8x256xf32> -> vector<8x256xf32>
    %60 = arith.addf %55, %59 : vector<8x256xf32>
    %61 = vector.extract_strided_slice %1 {offsets = [0, 18], sizes = [4, 256], strides = [1, 1]} : vector<4x290xf32> to vector<4x256xf32>
    %cst_25 = arith.constant 0.000000e+00 : f32
    %62 = vector.shape_cast %22 : vector<1x256xi1> to vector<1x256xi1>
    %63 = vector.broadcast %62 : vector<1x256xi1> to vector<4x256xi1>
    %64 = vector.broadcast %cst_25 : f32 to vector<4x256xf32>
    %65 = arith.select %63, %61, %64 : vector<4x256xi1>, vector<4x256xf32>
    %c5 = arith.constant 5 : index
    %c0_26 = arith.constant 0 : index
    %c0_27 = arith.constant 0 : index
    %66 = vector.load %arg2[%c5, %c0_26, %c0_27] : memref<9x8x4xf32, #tpu.memory_space<vmem>>, vector<1x8x4xf32>
    %67 = vector.shape_cast %66 : vector<1x8x4xf32> to vector<8x4xf32>
    %cst_28 = arith.constant dense<0.000000e+00> : vector<8x256xf32>
    %68 = tpu.matmul %67, %65, %cst_28 {dimension_numbers = #tpu.dot_dimension_numbers<[1], [0], [0], [1], [0, 0, 1, 1], [], []>} : vector<8x4xf32>, vector<4x256xf32>, vector<8x256xf32> -> vector<8x256xf32>
    %69 = arith.addf %60, %68 : vector<8x256xf32>
    %70 = vector.extract_strided_slice %1 {offsets = [0, 32], sizes = [4, 256], strides = [1, 1]} : vector<4x290xf32> to vector<4x256xf32>
    %cst_29 = arith.constant 0.000000e+00 : f32
    %71 = vector.shape_cast %20 : vector<1x256xi1> to vector<1x256xi1>
    %72 = vector.broadcast %71 : vector<1x256xi1> to vector<4x256xi1>
    %73 = vector.broadcast %cst_29 : f32 to vector<4x256xf32>
    %74 = arith.select %72, %70, %73 : vector<4x256xi1>, vector<4x256xf32>
    %c6 = arith.constant 6 : index
    %c0_30 = arith.constant 0 : index
    %c0_31 = arith.constant 0 : index
    %75 = vector.load %arg2[%c6, %c0_30, %c0_31] : memref<9x8x4xf32, #tpu.memory_space<vmem>>, vector<1x8x4xf32>
    %76 = vector.shape_cast %75 : vector<1x8x4xf32> to vector<8x4xf32>
    %cst_32 = arith.constant dense<0.000000e+00> : vector<8x256xf32>
    %77 = tpu.matmul %76, %74, %cst_32 {dimension_numbers = #tpu.dot_dimension_numbers<[1], [0], [0], [1], [0, 0, 1, 1], [], []>} : vector<8x4xf32>, vector<4x256xf32>, vector<8x256xf32> -> vector<8x256xf32>
    %78 = arith.addf %69, %77 : vector<8x256xf32>
    %79 = vector.extract_strided_slice %1 {offsets = [0, 33], sizes = [4, 256], strides = [1, 1]} : vector<4x290xf32> to vector<4x256xf32>
    %c7 = arith.constant 7 : index
    %c0_33 = arith.constant 0 : index
    %c0_34 = arith.constant 0 : index
    %80 = vector.load %arg2[%c7, %c0_33, %c0_34] : memref<9x8x4xf32, #tpu.memory_space<vmem>>, vector<1x8x4xf32>
    %81 = vector.shape_cast %80 : vector<1x8x4xf32> to vector<8x4xf32>
    %cst_35 = arith.constant dense<0.000000e+00> : vector<8x256xf32>
    %82 = tpu.matmul %81, %79, %cst_35 {dimension_numbers = #tpu.dot_dimension_numbers<[1], [0], [0], [1], [0, 0, 1, 1], [], []>} : vector<8x4xf32>, vector<4x256xf32>, vector<8x256xf32> -> vector<8x256xf32>
    %83 = arith.addf %78, %82 : vector<8x256xf32>
    %84 = vector.extract_strided_slice %1 {offsets = [0, 34], sizes = [4, 256], strides = [1, 1]} : vector<4x290xf32> to vector<4x256xf32>
    %cst_36 = arith.constant 0.000000e+00 : f32
    %85 = vector.shape_cast %22 : vector<1x256xi1> to vector<1x256xi1>
    %86 = vector.broadcast %85 : vector<1x256xi1> to vector<4x256xi1>
    %87 = vector.broadcast %cst_36 : f32 to vector<4x256xf32>
    %88 = arith.select %86, %84, %87 : vector<4x256xi1>, vector<4x256xf32>
    %c8 = arith.constant 8 : index
    %c0_37 = arith.constant 0 : index
    %c0_38 = arith.constant 0 : index
    %89 = vector.load %arg2[%c8, %c0_37, %c0_38] : memref<9x8x4xf32, #tpu.memory_space<vmem>>, vector<1x8x4xf32>
    %90 = vector.shape_cast %89 : vector<1x8x4xf32> to vector<8x4xf32>
    %cst_39 = arith.constant dense<0.000000e+00> : vector<8x256xf32>
    %91 = tpu.matmul %90, %88, %cst_39 {dimension_numbers = #tpu.dot_dimension_numbers<[1], [0], [0], [1], [0, 0, 1, 1], [], []>} : vector<8x4xf32>, vector<4x256xf32>, vector<8x256xf32> -> vector<8x256xf32>
    %92 = arith.addf %83, %91 : vector<8x256xf32>
    %c0_40 = arith.constant 0 : index
    %c0_41 = arith.constant 0 : index
    %93 = vector.load %arg3[%c0_40, %c0_41] : memref<8x1xf32, #tpu.memory_space<vmem>>, vector<8x1xf32>
    %94 = vector.broadcast %93 : vector<8x1xf32> to vector<8x256xf32>
    %95 = arith.addf %92, %94 : vector<8x256xf32>
    %cst_42 = arith.constant dense<0.000000e+00> : vector<8xf32>
    %96 = vector.multi_reduction <add>, %95, %cst_42 [1] : vector<8x256xf32> to vector<8xf32>
    %97 = vector.shape_cast %96 : vector<8xf32> to vector<8x1xf32>
    %cst_43 = arith.constant dense<0.000000e+00> : vector<8xf32>
    %98 = vector.multi_reduction <add>, %97, %cst_43 [1] : vector<8x1xf32> to vector<8xf32>
    %99 = vector.shape_cast %98 : vector<8xf32> to vector<8x1xf32>
    %cst_44 = arith.constant 2.560000e+02 : f32
    %100 = vector.broadcast %cst_44 : f32 to vector<8x1xf32>
    %101 = arith.divf %99, %100 : vector<8x1xf32>
    %102 = vector.broadcast %101 : vector<8x1xf32> to vector<8x256xf32>
    %103 = arith.subf %95, %102 : vector<8x256xf32>
    %104 = arith.mulf %103, %103 : vector<8x256xf32>
    %cst_45 = arith.constant dense<0.000000e+00> : vector<8xf32>
    %105 = vector.multi_reduction <add>, %104, %cst_45 [1] : vector<8x256xf32> to vector<8xf32>
    %106 = vector.shape_cast %105 : vector<8xf32> to vector<8x1xf32>
    %cst_46 = arith.constant dense<0.000000e+00> : vector<8xf32>
    %107 = vector.multi_reduction <add>, %106, %cst_46 [1] : vector<8x1xf32> to vector<8xf32>
    %108 = vector.shape_cast %107 : vector<8xf32> to vector<8x1xf32>
    %cst_47 = arith.constant 2.560000e+02 : f32
    %109 = vector.broadcast %cst_47 : f32 to vector<8x1xf32>
    %110 = arith.divf %108, %109 : vector<8x1xf32>
    %cst_48 = arith.constant 9.99999974E-6 : f32
    %111 = vector.broadcast %cst_48 : f32 to vector<8x1xf32>
    %112 = arith.addf %110, %111 : vector<8x1xf32>
    %113 = math.rsqrt %112 : vector<8x1xf32>
    %114 = vector.broadcast %113 : vector<8x1xf32> to vector<8x256xf32>
    %115 = arith.mulf %103, %114 : vector<8x256xf32>
    %c0_49 = arith.constant 0 : index
    %c0_50 = arith.constant 0 : index
    %116 = vector.load %arg4[%c0_49, %c0_50] : memref<8x1xf32, #tpu.memory_space<vmem>>, vector<8x1xf32>
    %117 = vector.broadcast %116 : vector<8x1xf32> to vector<8x256xf32>
    %118 = arith.mulf %115, %117 : vector<8x256xf32>
    %c0_51 = arith.constant 0 : index
    %c0_52 = arith.constant 0 : index
    %119 = vector.load %arg5[%c0_51, %c0_52] : memref<8x1xf32, #tpu.memory_space<vmem>>, vector<8x1xf32>
    %120 = vector.broadcast %119 : vector<8x1xf32> to vector<8x256xf32>
    %121 = arith.addf %118, %120 : vector<8x256xf32>
    %c0_53 = arith.constant 0 : index
    %c0_54 = arith.constant 0 : index
    %c0_55 = arith.constant 0 : index
    %122 = vector.load %arg6[%c0_53, %c0_54, %c0_55] : memref<1x8x1xf32, #tpu.memory_space<vmem>>, vector<1x8x1xf32>
    %123 = vector.shape_cast %122 : vector<1x8x1xf32> to vector<8x1xf32>
    %cst_56 = arith.constant 1.000000e+00 : f32
    %124 = vector.broadcast %cst_56 : f32 to vector<8x1xf32>
    %125 = arith.addf %123, %124 : vector<8x1xf32>
    %126 = vector.broadcast %125 : vector<8x1xf32> to vector<8x256xf32>
    %127 = arith.mulf %121, %126 : vector<8x256xf32>
    %c0_57 = arith.constant 0 : index
    %c0_58 = arith.constant 0 : index
    %c0_59 = arith.constant 0 : index
    %128 = vector.load %arg7[%c0_57, %c0_58, %c0_59] : memref<1x8x1xf32, #tpu.memory_space<vmem>>, vector<1x8x1xf32>
    %129 = vector.shape_cast %128 : vector<1x8x1xf32> to vector<8x1xf32>
    %130 = vector.broadcast %129 : vector<8x1xf32> to vector<8x256xf32>
    %131 = arith.addf %127, %130 : vector<8x256xf32>
    %132 = arith.negf %131 : vector<8x256xf32>
    %133 = math.exp %132 : vector<8x256xf32>
    %cst_60 = arith.constant 1.000000e+00 : f32
    %134 = vector.broadcast %cst_60 : f32 to vector<8x256xf32>
    %135 = arith.addf %134, %133 : vector<8x256xf32>
    %136 = arith.divf %134, %135 : vector<8x256xf32>
    %137 = arith.mulf %131, %136 : vector<8x256xf32>
    %c0_61 = arith.constant 0 : index
    %c0_62 = arith.constant 0 : index
    %c0_63 = arith.constant 0 : index
    %138 = vector.load %arg8[%c0_61, %c0_62, %c0_63] : memref<1x8x256xf32, #tpu.memory_space<vmem>>, vector<1x8x256xf32>
    %139 = vector.shape_cast %138 : vector<1x8x256xf32> to vector<8x256xf32>
    %140 = vector.shape_cast %137 : vector<8x256xf32> to vector<1x8x256xf32>
    tpu.vector_store %arg8[%c0_61, %c0_62, %c0_63], %140 {strides = array<i32>} : memref<1x8x256xf32, #tpu.memory_space<vmem>>, vector<1x8x256xf32>,
    return
  }
  func.func @transform_0(%arg0: i32) -> (i32, i32, i32) {
    %c0_i32 = arith.constant 0 : i32
    %c0_i32_0 = arith.constant 0 : i32
    %c0_i32_1 = arith.constant 0 : i32
    return %arg0, %c0_i32, %c0_i32_0 : i32, i32, i32
  }
  func.func @transform_1(%arg0: i32) -> (i32, i32, i32) {
    %c0_i32 = arith.constant 0 : i32
    %c0_i32_0 = arith.constant 0 : i32
    %c0_i32_1 = arith.constant 0 : i32
    %c0_i32_2 = arith.constant 0 : i32
    return %c0_i32, %c0_i32_0, %c0_i32_1 : i32, i32, i32
  }
  func.func @transform_2(%arg0: i32) -> (i32, i32) {
    %c0_i32 = arith.constant 0 : i32
    %c0_i32_0 = arith.constant 0 : i32
    %c0_i32_1 = arith.constant 0 : i32
    return %c0_i32, %c0_i32_0 : i32, i32
  }
  func.func @transform_3(%arg0: i32) -> (i32, i32) {
    %c0_i32 = arith.constant 0 : i32
    %c0_i32_0 = arith.constant 0 : i32
    %c0_i32_1 = arith.constant 0 : i32
    return %c0_i32, %c0_i32_0 : i32, i32
  }
  func.func @transform_4(%arg0: i32) -> (i32, i32) {
    %c0_i32 = arith.constant 0 : i32
    %c0_i32_0 = arith.constant 0 : i32
    %c0_i32_1 = arith.constant 0 : i32
    return %c0_i32, %c0_i32_0 : i32, i32
  }
  func.func @transform_5(%arg0: i32) -> (i32, i32, i32) {
    %c0_i32 = arith.constant 0 : i32
    %c0_i32_0 = arith.constant 0 : i32
    %c0_i32_1 = arith.constant 0 : i32
    return %arg0, %c0_i32, %c0_i32_0 : i32, i32, i32
  }
  func.func @transform_6(%arg0: i32) -> (i32, i32, i32) {
    %c0_i32 = arith.constant 0 : i32
    %c0_i32_0 = arith.constant 0 : i32
    %c0_i32_1 = arith.constant 0 : i32
    return %arg0, %c0_i32, %c0_i32_0 : i32, i32, i32
  }
  func.func @transform_7(%arg0: i32) -> (i32, i32, i32) {
    %c0_i32 = arith.constant 0 : i32
    %c0_i32_0 = arith.constant 0 : i32
    %c0_i32_1 = arith.constant 0 : i32
    return %arg0, %c0_i32, %c0_i32_0 : i32, i32, i32
  }
}

</mosaic_0001>

<llo_original>
// kernel: tpu_custom_call.1
$region0: #{tpu_custom_call.1}
  #allocation0 [shape = 'u32[]', space=smem, size = 0x4, offset = 0x4, fixed_abs, tag = 'smem constant byte address 0x4 - core index']
  #allocation1 [shape = 'u32[144,128]{1,0:T(1,128)}', space=vmem, size = 0x12000, scoped, tag = 'internal scratch']
  %s0 = inlined_call_operand.vmem [shape: f32[2,4,290], index: 0, kind: input, shape index: {}]
  %s1 = inlined_call_operand.vmem [shape: f32[9,8,4], index: 1, kind: input, shape index: {}]
  %s2 = inlined_call_operand.vmem [shape: f32[8,1], index: 2, kind: input, shape index: {}]
  %s3 = inlined_call_operand.vmem [shape: f32[8,1], index: 3, kind: input, shape index: {}]
  %s4 = inlined_call_operand.vmem [shape: f32[8,1], index: 4, kind: input, shape index: {}]
  %s5 = inlined_call_operand.vmem [shape: f32[2,8,1], index: 5, kind: input, shape index: {}]
  %s6 = inlined_call_operand.vmem [shape: f32[2,8,1], index: 6, kind: input, shape index: {}]
  %s7 = inlined_call_operand.hbm [shape: f32[2,8,256], index: 7, kind: output, shape index: {}]
  %s8 = sld [smem:[#allocation0]]
  $region61: #{tpu_custom_call.1} parent=0
    _
  %s10 = ssub.s32 1, %s8
  %s11 = scalar_select 0, %s10, %s8
  $region1: #{tpu_custom_call.1} parent=0
    #allocation2 [shape = 'u8[16384]{0}', space=vmem, size = 0x4000, scoped, tag = 'output window, operand 0']
    #allocation3 [shape = 's32[2]{0}', space=sflag, size = 0x8, scoped, tag = 'scoped memory for tpu_custom_call.1']
    %12 = vsyncpa [#allocation3], 0
    %s13 = scalar_lea.sflag [#allocation3], 1
    %14 = vsyncpa %s13, 0
    loop: start=0, step=1, limit=4
    $region2: #{tpu_custom_call.1} parent=1 // loop_pre_header
      _
    $region3: #{tpu_custom_call.1} parent=1 // loop_header
      %s16 = sphi 0, %s20
      %p17 = scmp.ge.s32.totalorder %s16, 4
      %s26 = sphi 0, %s28
      %s29 = sphi 0, %s26
      %s30 = sphi 0, %s29
      %s46 = sphi 0, %s30
      %s50 = sphi 0, %s50
      %s52 = sphi 0, %s50
      %s53 = sphi 0, %s52
      %s67 = sphi 0, %s53
      %s71 = sphi 0, %s71
      %s73 = sphi 0, %s71
      %s74 = sphi 0, %s73
      %s88 = sphi 0, %s74
      %s92 = sphi 0, %s92
      %s94 = sphi 0, %s92
      %s95 = sphi 0, %s94
      %s109 = sphi 0, %s95
      %s113 = sphi 0, %s113
      %s115 = sphi 0, %s113
      %s116 = sphi 0, %s115
      %s130 = sphi 0, %s116
      %s136 = sphi 0, %s138
      %s139 = sphi 0, %s136
      %s140 = sphi 0, %s139
      %s156 = sphi 0, %s140
      %s162 = sphi 0, %s164
      %s165 = sphi 0, %s162
      %s166 = sphi 0, %s165
      %s182 = sphi 0, %s166
      %s188 = sphi 0, %s190
      %s191 = sphi 0, %s188
      %s192 = sphi 0, %s191
      %s208 = sphi 0, %s192
    $region4: #{tpu_custom_call.1} parent=1 // loop_header_branch
      %19 = sbr.rel (%p17) target = $region8
    $region5: #{tpu_custom_call.1} parent=1 // loop_body
      %s21 = ssub.s32 %s16, 1
      %s22 = ssub.s32 %s16, 2
      %s23 = sadd.s32 %s16, 1
      %s24 = ssub.s32 %s16, %s23
      %p25 = scmp.eq.s32.totalorder %s24, 0
      %s27 = sadd.s32 %s26, 1
      %s28 = scalar_select %p25, %s26, %s27
      %p31 = pneg %p25
      %p32 = scmp.eq.s32.totalorder %s16, 1
      %p33 = por %p31, %p32
      %p34 = scmp.ne.s32.totalorder %s26, %s29
      %p35 = scmp.eq.s32.totalorder %s16, 0
      %p36 = por %p34, %p35
      %p37 = scmp.ne.s32.totalorder %s26, %s29
      %p38 = scmp.eq.s32.totalorder %s21, 1
      %p39 = por %p37, %p38
      %p40 = scmp.ne.s32.totalorder %s29, %s30
      %p41 = scmp.eq.s32.totalorder %s21, 0
      %p42 = por %p40, %p41
      %p43 = scmp.ne.s32.totalorder %s29, %s30
      %p44 = scmp.eq.s32.totalorder %s22, 1
      %p45 = por %p43, %p44
      %p47 = scmp.ne.s32.totalorder %s30, %s46
      %p48 = scmp.eq.s32.totalorder %s22, 0
      %p49 = por %p47, %p48
      %s51 = sadd.s32 %s50, 1
      %p54 = scmp.eq.s32.totalorder %s16, 1
      %p55 = scmp.ne.s32.totalorder %s50, %s52
      %p56 = scmp.eq.s32.totalorder %s16, 0
      %p57 = por %p55, %p56
      %p58 = scmp.ne.s32.totalorder %s50, %s52
      %p59 = scmp.eq.s32.totalorder %s21, 1
      %p60 = por %p58, %p59
      %p61 = scmp.ne.s32.totalorder %s52, %s53
      %p62 = scmp.eq.s32.totalorder %s21, 0
      %p63 = por %p61, %p62
      %p64 = scmp.ne.s32.totalorder %s52, %s53
      %p65 = scmp.eq.s32.totalorder %s22, 1
      %p66 = por %p64, %p65
      %p68 = scmp.ne.s32.totalorder %s53, %s67
      %p69 = scmp.eq.s32.totalorder %s22, 0
      %p70 = por %p68, %p69
      %s72 = sadd.s32 %s71, 1
      %p75 = scmp.eq.s32.totalorder %s16, 1
      %p76 = scmp.ne.s32.totalorder %s71, %s73
      %p77 = scmp.eq.s32.totalorder %s16, 0
      %p78 = por %p76, %p77
      %p79 = scmp.ne.s32.totalorder %s71, %s73
      %p80 = scmp.eq.s32.totalorder %s21, 1
      %p81 = por %p79, %p80
      %p82 = scmp.ne.s32.totalorder %s73, %s74
      %p83 = scmp.eq.s32.totalorder %s21, 0
      %p84 = por %p82, %p83
      %p85 = scmp.ne.s32.totalorder %s73, %s74
      %p86 = scmp.eq.s32.totalorder %s22, 1
      %p87 = por %p85, %p86
      %p89 = scmp.ne.s32.totalorder %s74, %s88
      %p90 = scmp.eq.s32.totalorder %s22, 0
      %p91 = por %p89, %p90
      %s93 = sadd.s32 %s92, 1
      %p96 = scmp.eq.s32.totalorder %s16, 1
      %p97 = scmp.ne.s32.totalorder %s92, %s94
      %p98 = scmp.eq.s32.totalorder %s16, 0
      %p99 = por %p97, %p98
      %p100 = scmp.ne.s32.totalorder %s92, %s94
      %p101 = scmp.eq.s32.totalorder %s21, 1
      %p102 = por %p100, %p101
      %p103 = scmp.ne.s32.totalorder %s94, %s95
      %p104 = scmp.eq.s32.totalorder %s21, 0
      %p105 = por %p103, %p104
      %p106 = scmp.ne.s32.totalorder %s94, %s95
      %p107 = scmp.eq.s32.totalorder %s22, 1
      %p108 = por %p106, %p107
      %p110 = scmp.ne.s32.totalorder %s95, %s109
      %p111 = scmp.eq.s32.totalorder %s22, 0
      %p112 = por %p110, %p111
      %s114 = sadd.s32 %s113, 1
      %p117 = scmp.eq.s32.totalorder %s16, 1
      %p118 = scmp.ne.s32.totalorder %s113, %s115
      %p119 = scmp.eq.s32.totalorder %s16, 0
      %p120 = por %p118, %p119
      %p121 = scmp.ne.s32.totalorder %s113, %s115
      %p122 = scmp.eq.s32.totalorder %s21, 1
      %p123 = por %p121, %p122
      %p124 = scmp.ne.s32.totalorder %s115, %s116
      %p125 = scmp.eq.s32.totalorder %s21, 0
      %p126 = por %p124, %p125
      %p127 = scmp.ne.s32.totalorder %s115, %s116
      %p128 = scmp.eq.s32.totalorder %s22, 1
      %p129 = por %p127, %p128
      %p131 = scmp.ne.s32.totalorder %s116, %s130
      %p132 = scmp.eq.s32.totalorder %s22, 0
      %p133 = por %p131, %p132
      %s134 = ssub.s32 %s16, %s23
      %p135 = scmp.eq.s32.totalorder %s134, 0
      %s137 = sadd.s32 %s136, 1
      %s138 = scalar_select %p135, %s136, %s137
      %p141 = pneg %p135
      %p142 = scmp.eq.s32.totalorder %s16, 1
      %p143 = por %p141, %p142
      %p144 = scmp.ne.s32.totalorder %s136, %s139
      %p145 = scmp.eq.s32.totalorder %s16, 0
      %p146 = por %p144, %p145
      %p147 = scmp.ne.s32.totalorder %s136, %s139
      %p148 = scmp.eq.s32.totalorder %s21, 1
      %p149 = por %p147, %p148
      %p150 = scmp.ne.s32.totalorder %s139, %s140
      %p151 = scmp.eq.s32.totalorder %s21, 0
      %p152 = por %p150, %p151
      %p153 = scmp.ne.s32.totalorder %s139, %s140
      %p154 = scmp.eq.s32.totalorder %s22, 1
      %p155 = por %p153, %p154
      %p157 = scmp.ne.s32.totalorder %s140, %s156
      %p158 = scmp.eq.s32.totalorder %s22, 0
      %p159 = por %p157, %p158
      %s160 = ssub.s32 %s16, %s23
      %p161 = scmp.eq.s32.totalorder %s160, 0
      %s163 = sadd.s32 %s162, 1
      %s164 = scalar_select %p161, %s162, %s163
      %p167 = pneg %p161
      %p168 = scmp.eq.s32.totalorder %s16, 1
      %p169 = por %p167, %p168
      %p170 = scmp.ne.s32.totalorder %s162, %s165
      %p171 = scmp.eq.s32.totalorder %s16, 0
      %p172 = por %p170, %p171
      %p173 = scmp.ne.s32.totalorder %s162, %s165
      %p174 = scmp.eq.s32.totalorder %s21, 1
      %p175 = por %p173, %p174
      %p176 = scmp.ne.s32.totalorder %s165, %s166
      %p177 = scmp.eq.s32.totalorder %s21, 0
      %p178 = por %p176, %p177
      %p179 = scmp.ne.s32.totalorder %s165, %s166
      %p180 = scmp.eq.s32.totalorder %s22, 1
      %p181 = por %p179, %p180
      %p183 = scmp.ne.s32.totalorder %s166, %s182
      %p184 = scmp.eq.s32.totalorder %s22, 0
      %p185 = por %p183, %p184
      %s186 = ssub.s32 %s16, %s23
      %p187 = scmp.eq.s32.totalorder %s186, 0
      %s189 = sadd.s32 %s188, 1
      %s190 = scalar_select %p187, %s188, %s189
      %p193 = pneg %p187
      %p194 = scmp.eq.s32.totalorder %s16, 1
      %p195 = por %p193, %p194
      %p196 = scmp.ne.s32.totalorder %s188, %s191
      %p197 = scmp.eq.s32.totalorder %s16, 0
      %p198 = por %p196, %p197
      %p199 = scmp.ne.s32.totalorder %s188, %s191
      %p200 = scmp.eq.s32.totalorder %s21, 1
      %p201 = por %p199, %p200
      %p202 = scmp.ne.s32.totalorder %s191, %s192
      %p203 = scmp.eq.s32.totalorder %s21, 0
      %p204 = por %p202, %p203
      %p205 = scmp.ne.s32.totalorder %s191, %s192
      %p206 = scmp.eq.s32.totalorder %s22, 1
      %p207 = por %p205, %p206
      %p209 = scmp.ne.s32.totalorder %s192, %s208
      %p210 = scmp.eq.s32.totalorder %s22, 0
      %p211 = por %p209, %p210
      %p212 = scmp.le.s32.totalorder 1, %s16
      %p213 = scmp.lt.s32.totalorder %s16, 3
      %p214 = pnand %p212, %p213
      %p215 = pneg %p214
      // Predicated region
      $region9: #{tpu_custom_call.1} parent=5 // pred_check
        _
      $region10: #{tpu_custom_call.1} parent=5 // pred_check_branch
        %217 = sbr.rel (%p214) target = $region12
      $region11: #{tpu_custom_call.1} parent=5 // pred_region
        %s218 = ssub.s32 %s16, 1
        // Predicated region
        $region13: #{tpu_custom_call.1} parent=11 // pred_check
          %p219 = pneg %p63
        $region14: #{tpu_custom_call.1} parent=11 // pred_check_branch
          %221 = sbr.rel (%p219) target = $region16
        $region15: #{tpu_custom_call.1} parent=11 // pred_region
          _
        $region16: #{tpu_custom_call.1} parent=11 // pred_fallthru
          _
        // Predicated region
        $region17: #{tpu_custom_call.1} parent=11 // pred_check
          %p222 = pneg %p84
        $region18: #{tpu_custom_call.1} parent=11 // pred_check_branch
          %224 = sbr.rel (%p222) target = $region20
        $region19: #{tpu_custom_call.1} parent=11 // pred_region
          _
        $region20: #{tpu_custom_call.1} parent=11 // pred_fallthru
          _
        // Predicated region
        $region21: #{tpu_custom_call.1} parent=11 // pred_check
          %p225 = pneg %p105
        $region22: #{tpu_custom_call.1} parent=11 // pred_check_branch
          %227 = sbr.rel (%p225) target = $region24
        $region23: #{tpu_custom_call.1} parent=11 // pred_region
          _
        $region24: #{tpu_custom_call.1} parent=11 // pred_fallthru
          _
        // Predicated region
        $region25: #{tpu_custom_call.1} parent=11 // pred_check
          %p228 = pneg %p126
        $region26: #{tpu_custom_call.1} parent=11 // pred_check_branch
          %230 = sbr.rel (%p228) target = $region28
        $region27: #{tpu_custom_call.1} parent=11 // pred_region
          _
        $region28: #{tpu_custom_call.1} parent=11 // pred_fallthru
          _
      $region12: #{tpu_custom_call.1} parent=5 // pred_fallthru
        _
      %p231 = scmp.lt.s32.totalorder %s16, 2
      // Predicated region
      $region29: #{tpu_custom_call.1} parent=5 // pred_check
        %p232 = pneg %p231
      $region30: #{tpu_custom_call.1} parent=5 // pred_check_branch
        %234 = sbr.rel (%p232) target = $region32
      $region31: #{tpu_custom_call.1} parent=5 // pred_region
        // Predicated region
        $region33: #{tpu_custom_call.1} parent=31 // pred_check
          %p235 = pneg %p36
        $region34: #{tpu_custom_call.1} parent=31 // pred_check_branch
          %237 = sbr.rel (%p235) target = $region36
        $region35: #{tpu_custom_call.1} parent=31 // pred_region
          %p238 = scmp.lt.s32.totalorder %s16, 1
          %s239 = scalar_select %p238, %s16, 1
          %s240 = smul.addr %s239, 3
          %s241 = smul.addr %s240, 4
          %s242 = scalar_lea.vmem %s0, %s241
        $region36: #{tpu_custom_call.1} parent=31 // pred_fallthru
          _
        // Predicated region
        $region37: #{tpu_custom_call.1} parent=31 // pred_check
          %p243 = pneg %p146
        $region38: #{tpu_custom_call.1} parent=31 // pred_check_branch
          %245 = sbr.rel (%p243) target = $region40
        $region39: #{tpu_custom_call.1} parent=31 // pred_region
          %p246 = scmp.lt.s32.totalorder %s16, 1
          %s247 = scalar_select %p246, %s16, 1
          %s248 = smul.addr %s247, 8
          %s249 = scalar_lea.vmem %s5, %s248
        $region40: #{tpu_custom_call.1} parent=31 // pred_fallthru
          _
        // Predicated region
        $region41: #{tpu_custom_call.1} parent=31 // pred_check
          %p250 = pneg %p172
        $region42: #{tpu_custom_call.1} parent=31 // pred_check_branch
          %252 = sbr.rel (%p250) target = $region44
        $region43: #{tpu_custom_call.1} parent=31 // pred_region
          %p253 = scmp.lt.s32.totalorder %s16, 1
          %s254 = scalar_select %p253, %s16, 1
          %s255 = smul.addr %s254, 8
          %s256 = scalar_lea.vmem %s6, %s255
        $region44: #{tpu_custom_call.1} parent=31 // pred_fallthru
          _
      $region32: #{tpu_custom_call.1} parent=5 // pred_fallthru
        _
      %p257 = scmp.le.s32.totalorder 1, %s16
      %p258 = scmp.lt.s32.totalorder %s16, 3
      %p259 = pnand %p257, %p258
      %p260 = pneg %p259
      // Predicated region
      $region45: #{tpu_custom_call.1} parent=5 // pred_check
        _
      $region46: #{tpu_custom_call.1} parent=5 // pred_check_branch
        %262 = sbr.rel (%p259) target = $region48
      $region47: #{tpu_custom_call.1} parent=5 // pred_region
        %s263 = ssub.s32 %s16, 1
        %p264 = scmp.lt.s32.totalorder %s21, 1
        %s265 = scalar_select %p264, %s21, 1
        %s266 = smul.addr %s265, 3
        %s267 = smul.addr %s266, 4
        %s268 = scalar_lea.vmem %s0, %s267
        %p269 = pneg %p42
        %p270 = pneg %p39
        %p271 = pneg %p63
        %p272 = pneg %p60
        %p273 = pneg %p84
        %p274 = pneg %p81
        %p275 = pneg %p105
        %p276 = pneg %p102
        %p277 = pneg %p126
        %p278 = pneg %p123
        %p279 = scmp.lt.s32.totalorder %s21, 1
        %s280 = scalar_select %p279, %s21, 1
        %s281 = smul.addr %s280, 8
        %s282 = scalar_lea.vmem %s5, %s281
        %p283 = pneg %p152
        %p284 = pneg %p149
        %p285 = scmp.lt.s32.totalorder %s21, 1
        %s286 = scalar_select %p285, %s21, 1
        %s287 = smul.addr %s286, 8
        %s288 = scalar_lea.vmem %s6, %s287
        %p289 = pneg %p178
        %p290 = pneg %p175
        %p291 = pneg %p204
        %p292 = pneg %p201
        %s293 = sand.u32 %s191, 1
        %s294 = scalar_lea.sflag [#allocation3], %s293
        %s295 = sand.u32 %s191, 1
        %s296 = smul.addr %s295, 16
        %s297 = scalar_lea.vmem [#allocation2], %s296
        %p298 = scmp.lt.s32.totalorder %s21, 1
        %s299 = scalar_select %p298, %s21, 1
        %s300 = smul.addr %s299, 3
        %s301 = smul.addr %s300, 4
        %s302 = scalar_lea.vmem %s0, %s301
        %p303 = scmp.lt.s32.totalorder %s21, 1
        %s304 = scalar_select %p303, %s21, 1
        %s305 = smul.addr %s304, 8
        %s306 = scalar_lea.vmem %s5, %s305
        %p307 = scmp.lt.s32.totalorder %s21, 1
        %s308 = scalar_select %p307, %s21, 1
        %s309 = smul.addr %s308, 8
        %s310 = scalar_lea.vmem %s6, %s309
        %v311 = vld [vmem:[%s302] sm:$0xff]
        %v312 = vld [vmem:[%s302 + $0x8] sm:$0xf]
        %v313 = vlaneseq
        %v314 = vand.u32 %v313, 127
        %v315 = vadd.s32 %v314, 128
        %vm316 = vcmp.lt.s32.totalorder %v314, 0
        %v317 = vsub.s32 0, %v314
        %v318 = vsel %vm316, %v317, %v314
        %v319 = vshrl.u32 %v318, 4
        %v320 = vand.u32 %v318, 15
        %v321 = vsub.s32 0, %v320
        %v322 = vsel %vm316, %v321, %v320
        %vm323 = vcmp.lt.s32.totalorder %v315, 0
        %v324 = vsub.s32 0, %v315
        %v325 = vsel %vm323, %v324, %v315
        %v326 = vshrl.u32 %v325, 4
        %v327 = vand.u32 %v325, 15
        %v328 = vsub.s32 0, %v327
        %v329 = vsel %vm323, %v328, %v327
        %vm330 = vcmp.ne.s32.totalorder %v322, 0
        %vm331 = vcmp.ne.s32.totalorder %v329, 0
        %vm332 = vcmp.lt.s32.totalorder %v322, 0
        %vm333 = vcmp.lt.s32.totalorder %v329, 0
        %vm334 = vmand %vm332, %vm330
        %vm335 = vmand %vm333, %vm331
        %v336 = vadd.s32 %v322, 16
        %v337 = vadd.s32 %v329, 16
        %v338 = vsel %vm334, %v336, %v322
        %v339 = vsel %vm335, %v337, %v329
        %vm340 = vcmp.ge.s32.totalorder %v338, 1
        %vm341 = vcmp.ge.s32.totalorder %v339, 1
        %vm342 = vcmp.le.s32.totalorder %v338, 14
        %vm343 = vcmp.le.s32.totalorder %v339, 14
        %v344 = vsel %vm340, 1, 0
        %v345 = vsel %vm341, 1, 0
        %vm346 = vcmp.eq.s32.totalorder %v344, 1
        %vm347 = vcmp.eq.s32.totalorder %v345, 1
        %v349 = vcombine.high %v311, %v311
        %v351 = vsel %vm346, %v311, 0.0
        %v352 = vsel %vm347, %v349, 0.0
        %v353 = vld [vmem:[%s1] sm:$0xff]
        %s354 = scalar_lea.vmem %s1, 8
        %v355 = vld [vmem:[%s354] sm:$0xff]
        %357 = vrot.lane.b32.xlu0 %v311, 127
        %v358 = vpop.permute.xlu0 %357
        %359 = vrot.lane.b32.xlu0 %v349, 127
        %v360 = vpop.permute.xlu0 %359
        %361 = vrot.lane.b32.xlu0 %v312, 127
        %v362 = vpop.permute.xlu0 %361
        %vm363 = vcmask 1039360
        %v364 = vsel %vm363, %v358, %v360
        %v365 = vsel %vm363, %v360, %v362
        %vm366 = vcmask 31744
        %v368 = vsel %vm366, %v355, 0
        %vm370 = vcmask 1043456
        %v371 = vsel %vm370, %v364, 0
        %v373 = vsel %vm370, %v365, 0
        %375 = vmatprep.subr.mxu0 0.0
        %376 = vmatpush1.msra.mxu0 0.0
        %377 = vmatprep.subr.mxu0 0.0
        %378 = vmatpush1.msra.mxu0 0.0
        %379 = vmatprep.subr.mxu0 0.0
        %380 = vmatpush1.msra.mxu0 0.0
        %381 = vmatprep.subr.mxu0 0.0
        %382 = vmatpush1.msra.mxu0 0.0
        %383 = vmatprep.subr.mxu0 0.0
        %384 = vmatpush1.msra.mxu0 0.0
        %385 = vmatprep.subr.mxu0 0.0
        %386 = vmatpush1.msra.mxu0 0.0
        %387 = vmatprep.subr.mxu0 0.0
        %388 = vmatpush1.msra.mxu0 0.0
        %389 = vmatprep.subr.mxu0 0.0
        %390 = vmatpush1.msra.mxu0 0.0
        %391 = vmatprep.subr.mxu0 0.0
        %392 = vmatpush1.msra.mxu0 0.0
        %393 = vmatprep.subr.mxu0 0.0
        %394 = vmatpush1.msra.mxu0 0.0
        %395 = vmatprep.subr.mxu0 0.0
        %396 = vmatpush1.msra.mxu0 0.0
        %397 = vmatprep.subr.mxu0 0.0
        %398 = vmatpush1.msra.mxu0 0.0
        %399 = vmatprep.subr.mxu0 0.0
        %400 = vmatpush1.msra.mxu0 0.0
        %401 = vmatprep.subr.mxu0 0.0
        %402 = vmatpush1.msra.mxu0 0.0
        %403 = vmatprep.subr.mxu0 0.0
        %404 = vmatpush1.msra.mxu0 0.0
        %405 = vmatprep.subr.mxu0 %v373
        %406 = vmatpush1.msra.mxu0 %v371
        %407 = vmatprep.subr.mxu0 0.0
        %408 = vmatpush2.msra.mxu0 0.0
        %409 = vmatprep.subr.mxu0 0.0
        %410 = vmatpush2.msra.mxu0 0.0
        %411 = vmatprep.subr.mxu0 0.0
        %412 = vmatpush2.msra.mxu0 0.0
        %413 = vmatprep.subr.mxu0 0.0
        %414 = vmatpush2.msra.mxu0 0.0
        %415 = vmatprep.subr.mxu0 0.0
        %416 = vmatpush2.msra.mxu0 0.0
        %417 = vmatprep.subr.mxu0 0.0
        %418 = vmatpush2.msra.mxu0 0.0
        %419 = vmatprep.subr.mxu0 0.0
        %420 = vmatpush2.msra.mxu0 0.0
        %421 = vmatprep.subr.mxu0 0.0
        %422 = vmatpush2.msra.mxu0 0.0
        %423 = vmatprep.subr.mxu0 0.0
        %424 = vmatpush2.msra.mxu0 0.0
        %425 = vmatprep.subr.mxu0 0.0
        %426 = vmatpush2.msra.mxu0 0.0
        %427 = vmatprep.subr.mxu0 0.0
        %428 = vmatpush2.msra.mxu0 0.0
        %429 = vmatprep.subr.mxu0 0.0
        %430 = vmatpush2.msra.mxu0 0.0
        %431 = vmatprep.subr.mxu0 0.0
        %432 = vmatpush2.msra.mxu0 0.0
        %433 = vmatprep.subr.mxu0 0.0
        %434 = vmatpush2.msra.mxu0 0.0
        %435 = vmatprep.subr.mxu0 0.0
        %436 = vmatpush2.msra.mxu0 0.0
        %437 = vmatprep.subr.mxu0 0.0
        %438 = vmatpush2.msra.mxu0 0.0
        %439 = vmatprep.mubr.f32.mxu0 0.0
        %440 = vmatmul.mubr.f32.gmra.mxu0 %v368
        %v441 = vpop.f32.mrf.mxu0
        %v442 = vadd.f32 0.0, %v441
        %v443 = vpop.f32.mrf.mxu0
        %v444 = vadd.f32 0.0, %v443
        %445 = vdwg.mxu0
        %v447 = vsel %vm366, %v353, 0
        %v450 = vsel %vm370, %v351, 0
        %v453 = vsel %vm370, %v352, 0
        %455 = vmatprep.subr.mxu0 0.0
        %456 = vmatpush1.msra.mxu0 0.0
        %457 = vmatprep.subr.mxu0 0.0
        %458 = vmatpush1.msra.mxu0 0.0
        %459 = vmatprep.subr.mxu0 0.0
        %460 = vmatpush1.msra.mxu0 0.0
        %461 = vmatprep.subr.mxu0 0.0
        %462 = vmatpush1.msra.mxu0 0.0
        %463 = vmatprep.subr.mxu0 0.0
        %464 = vmatpush1.msra.mxu0 0.0
        %465 = vmatprep.subr.mxu0 0.0
        %466 = vmatpush1.msra.mxu0 0.0
        %467 = vmatprep.subr.mxu0 0.0
        %468 = vmatpush1.msra.mxu0 0.0
        %469 = vmatprep.subr.mxu0 0.0
        %470 = vmatpush1.msra.mxu0 0.0
        %471 = vmatprep.subr.mxu0 0.0
        %472 = vmatpush1.msra.mxu0 0.0
        %473 = vmatprep.subr.mxu0 0.0
        %474 = vmatpush1.msra.mxu0 0.0
        %475 = vmatprep.subr.mxu0 0.0
        %476 = vmatpush1.msra.mxu0 0.0
        %477 = vmatprep.subr.mxu0 0.0
        %478 = vmatpush1.msra.mxu0 0.0
        %479 = vmatprep.subr.mxu0 0.0
        %480 = vmatpush1.msra.mxu0 0.0
        %481 = vmatprep.subr.mxu0 0.0
        %482 = vmatpush1.msra.mxu0 0.0
        %483 = vmatprep.subr.mxu0 0.0
        %484 = vmatpush1.msra.mxu0 0.0
        %485 = vmatprep.subr.mxu0 %v453
        %486 = vmatpush1.msra.mxu0 %v450
        %487 = vmatprep.subr.mxu0 0.0
        %488 = vmatpush2.msra.mxu0 0.0
        %489 = vmatprep.subr.mxu0 0.0
        %490 = vmatpush2.msra.mxu0 0.0
        %491 = vmatprep.subr.mxu0 0.0
        %492 = vmatpush2.msra.mxu0 0.0
        %493 = vmatprep.subr.mxu0 0.0
        %494 = vmatpush2.msra.mxu0 0.0
        %495 = vmatprep.subr.mxu0 0.0
        %496 = vmatpush2.msra.mxu0 0.0
        %497 = vmatprep.subr.mxu0 0.0
        %498 = vmatpush2.msra.mxu0 0.0
        %499 = vmatprep.subr.mxu0 0.0
        %500 = vmatpush2.msra.mxu0 0.0
        %501 = vmatprep.subr.mxu0 0.0
        %502 = vmatpush2.msra.mxu0 0.0
        %503 = vmatprep.subr.mxu0 0.0
        %504 = vmatpush2.msra.mxu0 0.0
        %505 = vmatprep.subr.mxu0 0.0
        %506 = vmatpush2.msra.mxu0 0.0
        %507 = vmatprep.subr.mxu0 0.0
        %508 = vmatpush2.msra.mxu0 0.0
        %509 = vmatprep.subr.mxu0 0.0
        %510 = vmatpush2.msra.mxu0 0.0
        %511 = vmatprep.subr.mxu0 0.0
        %512 = vmatpush2.msra.mxu0 0.0
        %513 = vmatprep.subr.mxu0 0.0
        %514 = vmatpush2.msra.mxu0 0.0
        %515 = vmatprep.subr.mxu0 0.0
        %516 = vmatpush2.msra.mxu0 0.0
        %517 = vmatprep.subr.mxu0 0.0
        %518 = vmatpush2.msra.mxu0 0.0
        %519 = vmatprep.mubr.f32.mxu0 0.0
        %520 = vmatmul.mubr.f32.gmra.mxu0 %v447
        %v521 = vpop.f32.mrf.mxu0
        %v522 = vadd.f32 %v442, %v521
        %v523 = vpop.f32.mrf.mxu0
        %v524 = vadd.f32 %v444, %v523
        %525 = vdwg.mxu0
        %v526 = vsel %vm342, 1, 0
        %v527 = vsel %vm343, 1, 0
        %vm528 = vcmp.eq.s32.totalorder %v526, 1
        %vm529 = vcmp.eq.s32.totalorder %v527, 1
        %530 = vrot.lane.b32.xlu0 %v311, 126
        %v531 = vpop.permute.xlu0 %530
        %532 = vrot.lane.b32.xlu0 %v349, 126
        %v533 = vpop.permute.xlu0 %532
        %534 = vrot.lane.b32.xlu0 %v312, 126
        %v535 = vpop.permute.xlu0 %534
        %vm536 = vcmask 1031168
        %v537 = vsel %vm536, %v531, %v533
        %v538 = vsel %vm536, %v533, %v535
        %v541 = vsel %vm528, %v537, 0.0
        %v542 = vsel %vm529, %v538, 0.0
        %s543 = scalar_lea.vmem %s1, 16
        %v544 = vld [vmem:[%s543] sm:$0xff]
        %v546 = vsel %vm366, %v544, 0
        %v549 = vsel %vm370, %v541, 0
        %v552 = vsel %vm370, %v542, 0
        %554 = vmatprep.subr.mxu0 0.0
        %555 = vmatpush1.msra.mxu0 0.0
        %556 = vmatprep.subr.mxu0 0.0
        %557 = vmatpush1.msra.mxu0 0.0
        %558 = vmatprep.subr.mxu0 0.0
        %559 = vmatpush1.msra.mxu0 0.0
        %560 = vmatprep.subr.mxu0 0.0
        %561 = vmatpush1.msra.mxu0 0.0
        %562 = vmatprep.subr.mxu0 0.0
        %563 = vmatpush1.msra.mxu0 0.0
        %564 = vmatprep.subr.mxu0 0.0
        %565 = vmatpush1.msra.mxu0 0.0
        %566 = vmatprep.subr.mxu0 0.0
        %567 = vmatpush1.msra.mxu0 0.0
        %568 = vmatprep.subr.mxu0 0.0
        %569 = vmatpush1.msra.mxu0 0.0
        %570 = vmatprep.subr.mxu0 0.0
        %571 = vmatpush1.msra.mxu0 0.0
        %572 = vmatprep.subr.mxu0 0.0
        %573 = vmatpush1.msra.mxu0 0.0
        %574 = vmatprep.subr.mxu0 0.0
        %575 = vmatpush1.msra.mxu0 0.0
        %576 = vmatprep.subr.mxu0 0.0
        %577 = vmatpush1.msra.mxu0 0.0
        %578 = vmatprep.subr.mxu0 0.0
        %579 = vmatpush1.msra.mxu0 0.0
        %580 = vmatprep.subr.mxu0 0.0
        %581 = vmatpush1.msra.mxu0 0.0
        %582 = vmatprep.subr.mxu0 0.0
        %583 = vmatpush1.msra.mxu0 0.0
        %584 = vmatprep.subr.mxu0 %v552
        %585 = vmatpush1.msra.mxu0 %v549
        %586 = vmatprep.subr.mxu0 0.0
        %587 = vmatpush2.msra.mxu0 0.0
        %588 = vmatprep.subr.mxu0 0.0
        %589 = vmatpush2.msra.mxu0 0.0
        %590 = vmatprep.subr.mxu0 0.0
        %591 = vmatpush2.msra.mxu0 0.0
        %592 = vmatprep.subr.mxu0 0.0
        %593 = vmatpush2.msra.mxu0 0.0
        %594 = vmatprep.subr.mxu0 0.0
        %595 = vmatpush2.msra.mxu0 0.0
        %596 = vmatprep.subr.mxu0 0.0
        %597 = vmatpush2.msra.mxu0 0.0
        %598 = vmatprep.subr.mxu0 0.0
        %599 = vmatpush2.msra.mxu0 0.0
        %600 = vmatprep.subr.mxu0 0.0
        %601 = vmatpush2.msra.mxu0 0.0
        %602 = vmatprep.subr.mxu0 0.0
        %603 = vmatpush2.msra.mxu0 0.0
        %604 = vmatprep.subr.mxu0 0.0
        %605 = vmatpush2.msra.mxu0 0.0
        %606 = vmatprep.subr.mxu0 0.0
        %607 = vmatpush2.msra.mxu0 0.0
        %608 = vmatprep.subr.mxu0 0.0
        %609 = vmatpush2.msra.mxu0 0.0
        %610 = vmatprep.subr.mxu0 0.0
        %611 = vmatpush2.msra.mxu0 0.0
        %612 = vmatprep.subr.mxu0 0.0
        %613 = vmatpush2.msra.mxu0 0.0
        %614 = vmatprep.subr.mxu0 0.0
        %615 = vmatpush2.msra.mxu0 0.0
        %616 = vmatprep.subr.mxu0 0.0
        %617 = vmatpush2.msra.mxu0 0.0
        %618 = vmatprep.mubr.f32.mxu0 0.0
        %619 = vmatmul.mubr.f32.gmra.mxu0 %v546
        %v620 = vpop.f32.mrf.mxu0
        %v621 = vadd.f32 0.0, %v620
        %v622 = vpop.f32.mrf.mxu0
        %v623 = vadd.f32 0.0, %v622
        %624 = vdwg.mxu0
        %v625 = vadd.f32 %v522, %v621
        %v626 = vadd.f32 %v524, %v623
        %627 = vrot.lane.b32.xlu0 %v311, 112
        %v628 = vpop.permute.xlu0 %627
        %629 = vrot.lane.b32.xlu0 %v349, 112
        %v630 = vpop.permute.xlu0 %629
        %631 = vrot.lane.b32.xlu0 %v312, 112
        %v632 = vpop.permute.xlu0 %631
        %vm633 = vcmask 916480
        %v634 = vsel %vm633, %v628, %v630
        %v635 = vsel %vm633, %v630, %v632
        %v638 = vsel %vm346, %v634, 0.0
        %v639 = vsel %vm347, %v635, 0.0
        %s640 = scalar_lea.vmem %s1, 24
        %v641 = vld [vmem:[%s640] sm:$0xff]
        %v643 = vsel %vm366, %v641, 0
        %v646 = vsel %vm370, %v638, 0
        %v649 = vsel %vm370, %v639, 0
        %651 = vmatprep.subr.mxu0 0.0
        %652 = vmatpush1.msra.mxu0 0.0
        %653 = vmatprep.subr.mxu0 0.0
        %654 = vmatpush1.msra.mxu0 0.0
        %655 = vmatprep.subr.mxu0 0.0
        %656 = vmatpush1.msra.mxu0 0.0
        %657 = vmatprep.subr.mxu0 0.0
        %658 = vmatpush1.msra.mxu0 0.0
        %659 = vmatprep.subr.mxu0 0.0
        %660 = vmatpush1.msra.mxu0 0.0
        %661 = vmatprep.subr.mxu0 0.0
        %662 = vmatpush1.msra.mxu0 0.0
        %663 = vmatprep.subr.mxu0 0.0
        %664 = vmatpush1.msra.mxu0 0.0
        %665 = vmatprep.subr.mxu0 0.0
        %666 = vmatpush1.msra.mxu0 0.0
        %667 = vmatprep.subr.mxu0 0.0
        %668 = vmatpush1.msra.mxu0 0.0
        %669 = vmatprep.subr.mxu0 0.0
        %670 = vmatpush1.msra.mxu0 0.0
        %671 = vmatprep.subr.mxu0 0.0
        %672 = vmatpush1.msra.mxu0 0.0
        %673 = vmatprep.subr.mxu0 0.0
        %674 = vmatpush1.msra.mxu0 0.0
        %675 = vmatprep.subr.mxu0 0.0
        %676 = vmatpush1.msra.mxu0 0.0
        %677 = vmatprep.subr.mxu0 0.0
        %678 = vmatpush1.msra.mxu0 0.0
        %679 = vmatprep.subr.mxu0 0.0
        %680 = vmatpush1.msra.mxu0 0.0
        %681 = vmatprep.subr.mxu0 %v649
        %682 = vmatpush1.msra.mxu0 %v646
        %683 = vmatprep.subr.mxu0 0.0
        %684 = vmatpush2.msra.mxu0 0.0
        %685 = vmatprep.subr.mxu0 0.0
        %686 = vmatpush2.msra.mxu0 0.0
        %687 = vmatprep.subr.mxu0 0.0
        %688 = vmatpush2.msra.mxu0 0.0
        %689 = vmatprep.subr.mxu0 0.0
        %690 = vmatpush2.msra.mxu0 0.0
        %691 = vmatprep.subr.mxu0 0.0
        %692 = vmatpush2.msra.mxu0 0.0
        %693 = vmatprep.subr.mxu0 0.0
        %694 = vmatpush2.msra.mxu0 0.0
        %695 = vmatprep.subr.mxu0 0.0
        %696 = vmatpush2.msra.mxu0 0.0
        %697 = vmatprep.subr.mxu0 0.0
        %698 = vmatpush2.msra.mxu0 0.0
        %699 = vmatprep.subr.mxu0 0.0
        %700 = vmatpush2.msra.mxu0 0.0
        %701 = vmatprep.subr.mxu0 0.0
        %702 = vmatpush2.msra.mxu0 0.0
        %703 = vmatprep.subr.mxu0 0.0
        %704 = vmatpush2.msra.mxu0 0.0
        %705 = vmatprep.subr.mxu0 0.0
        %706 = vmatpush2.msra.mxu0 0.0
        %707 = vmatprep.subr.mxu0 0.0
        %708 = vmatpush2.msra.mxu0 0.0
        %709 = vmatprep.subr.mxu0 0.0
        %710 = vmatpush2.msra.mxu0 0.0
        %711 = vmatprep.subr.mxu0 0.0
        %712 = vmatpush2.msra.mxu0 0.0
        %713 = vmatprep.subr.mxu0 0.0
        %714 = vmatpush2.msra.mxu0 0.0
        %715 = vmatprep.mubr.f32.mxu0 0.0
        %716 = vmatmul.mubr.f32.gmra.mxu0 %v643
        %v717 = vpop.f32.mrf.mxu0
        %v718 = vadd.f32 0.0, %v717
        %v719 = vpop.f32.mrf.mxu0
        %v720 = vadd.f32 0.0, %v719
        %721 = vdwg.mxu0
        %v722 = vadd.f32 %v625, %v718
        %v723 = vadd.f32 %v626, %v720
        %s724 = scalar_lea.vmem %s1, 32
        %v725 = vld [vmem:[%s724] sm:$0xff]
        %726 = vrot.lane.b32.xlu0 %v311, 111
        %v727 = vpop.permute.xlu0 %726
        %728 = vrot.lane.b32.xlu0 %v349, 111
        %v729 = vpop.permute.xlu0 %728
        %730 = vrot.lane.b32.xlu0 %v312, 111
        %v731 = vpop.permute.xlu0 %730
        %vm732 = vcmask 908288
        %v733 = vsel %vm732, %v727, %v729
        %v734 = vsel %vm732, %v729, %v731
        %v736 = vsel %vm366, %v725, 0
        %v738 = vsel %vm370, %v733, 0
        %v740 = vsel %vm370, %v734, 0
        %742 = vmatprep.subr.mxu0 0.0
        %743 = vmatpush1.msra.mxu0 0.0
        %744 = vmatprep.subr.mxu0 0.0
        %745 = vmatpush1.msra.mxu0 0.0
        %746 = vmatprep.subr.mxu0 0.0
        %747 = vmatpush1.msra.mxu0 0.0
        %748 = vmatprep.subr.mxu0 0.0
        %749 = vmatpush1.msra.mxu0 0.0
        %750 = vmatprep.subr.mxu0 0.0
        %751 = vmatpush1.msra.mxu0 0.0
        %752 = vmatprep.subr.mxu0 0.0
        %753 = vmatpush1.msra.mxu0 0.0
        %754 = vmatprep.subr.mxu0 0.0
        %755 = vmatpush1.msra.mxu0 0.0
        %756 = vmatprep.subr.mxu0 0.0
        %757 = vmatpush1.msra.mxu0 0.0
        %758 = vmatprep.subr.mxu0 0.0
        %759 = vmatpush1.msra.mxu0 0.0
        %760 = vmatprep.subr.mxu0 0.0
        %761 = vmatpush1.msra.mxu0 0.0
        %762 = vmatprep.subr.mxu0 0.0
        %763 = vmatpush1.msra.mxu0 0.0
        %764 = vmatprep.subr.mxu0 0.0
        %765 = vmatpush1.msra.mxu0 0.0
        %766 = vmatprep.subr.mxu0 0.0
        %767 = vmatpush1.msra.mxu0 0.0
        %768 = vmatprep.subr.mxu0 0.0
        %769 = vmatpush1.msra.mxu0 0.0
        %770 = vmatprep.subr.mxu0 0.0
        %771 = vmatpush1.msra.mxu0 0.0
        %772 = vmatprep.subr.mxu0 %v740
        %773 = vmatpush1.msra.mxu0 %v738
        %774 = vmatprep.subr.mxu0 0.0
        %775 = vmatpush2.msra.mxu0 0.0
        %776 = vmatprep.subr.mxu0 0.0
        %777 = vmatpush2.msra.mxu0 0.0
        %778 = vmatprep.subr.mxu0 0.0
        %779 = vmatpush2.msra.mxu0 0.0
        %780 = vmatprep.subr.mxu0 0.0
        %781 = vmatpush2.msra.mxu0 0.0
        %782 = vmatprep.subr.mxu0 0.0
        %783 = vmatpush2.msra.mxu0 0.0
        %784 = vmatprep.subr.mxu0 0.0
        %785 = vmatpush2.msra.mxu0 0.0
        %786 = vmatprep.subr.mxu0 0.0
        %787 = vmatpush2.msra.mxu0 0.0
        %788 = vmatprep.subr.mxu0 0.0
        %789 = vmatpush2.msra.mxu0 0.0
        %790 = vmatprep.subr.mxu0 0.0
        %791 = vmatpush2.msra.mxu0 0.0
        %792 = vmatprep.subr.mxu0 0.0
        %793 = vmatpush2.msra.mxu0 0.0
        %794 = vmatprep.subr.mxu0 0.0
        %795 = vmatpush2.msra.mxu0 0.0
        %796 = vmatprep.subr.mxu0 0.0
        %797 = vmatpush2.msra.mxu0 0.0
        %798 = vmatprep.subr.mxu0 0.0
        %799 = vmatpush2.msra.mxu0 0.0
        %800 = vmatprep.subr.mxu0 0.0
        %801 = vmatpush2.msra.mxu0 0.0
        %802 = vmatprep.subr.mxu0 0.0
        %803 = vmatpush2.msra.mxu0 0.0
        %804 = vmatprep.subr.mxu0 0.0
        %805 = vmatpush2.msra.mxu0 0.0
        %806 = vmatprep.mubr.f32.mxu0 0.0
        %807 = vmatmul.mubr.f32.gmra.mxu0 %v736
        %v808 = vpop.f32.mrf.mxu0
        %v809 = vadd.f32 0.0, %v808
        %v810 = vpop.f32.mrf.mxu0
        %v811 = vadd.f32 0.0, %v810
        %812 = vdwg.mxu0
        %v813 = vadd.f32 %v722, %v809
        %v814 = vadd.f32 %v723, %v811
        %815 = vrot.lane.b32.xlu0 %v311, 110
        %v816 = vpop.permute.xlu0 %815
        %817 = vrot.lane.b32.xlu0 %v349, 110
        %v818 = vpop.permute.xlu0 %817
        %819 = vrot.lane.b32.xlu0 %v312, 110
        %v820 = vpop.permute.xlu0 %819
        %vm821 = vcmask 900096
        %v822 = vsel %vm821, %v816, %v818
        %v823 = vsel %vm821, %v818, %v820
        %v826 = vsel %vm528, %v822, 0.0
        %v827 = vsel %vm529, %v823, 0.0
        %s828 = scalar_lea.vmem %s1, 40
        %v829 = vld [vmem:[%s828] sm:$0xff]
        %v831 = vsel %vm366, %v829, 0
        %v834 = vsel %vm370, %v826, 0
        %v837 = vsel %vm370, %v827, 0
        %839 = vmatprep.subr.mxu0 0.0
        %840 = vmatpush1.msra.mxu0 0.0
        %841 = vmatprep.subr.mxu0 0.0
        %842 = vmatpush1.msra.mxu0 0.0
        %843 = vmatprep.subr.mxu0 0.0
        %844 = vmatpush1.msra.mxu0 0.0
        %845 = vmatprep.subr.mxu0 0.0
        %846 = vmatpush1.msra.mxu0 0.0
        %847 = vmatprep.subr.mxu0 0.0
        %848 = vmatpush1.msra.mxu0 0.0
        %849 = vmatprep.subr.mxu0 0.0
        %850 = vmatpush1.msra.mxu0 0.0
        %851 = vmatprep.subr.mxu0 0.0
        %852 = vmatpush1.msra.mxu0 0.0
        %853 = vmatprep.subr.mxu0 0.0
        %854 = vmatpush1.msra.mxu0 0.0
        %855 = vmatprep.subr.mxu0 0.0
        %856 = vmatpush1.msra.mxu0 0.0
        %857 = vmatprep.subr.mxu0 0.0
        %858 = vmatpush1.msra.mxu0 0.0
        %859 = vmatprep.subr.mxu0 0.0
        %860 = vmatpush1.msra.mxu0 0.0
        %861 = vmatprep.subr.mxu0 0.0
        %862 = vmatpush1.msra.mxu0 0.0
        %863 = vmatprep.subr.mxu0 0.0
        %864 = vmatpush1.msra.mxu0 0.0
        %865 = vmatprep.subr.mxu0 0.0
        %866 = vmatpush1.msra.mxu0 0.0
        %867 = vmatprep.subr.mxu0 0.0
        %868 = vmatpush1.msra.mxu0 0.0
        %869 = vmatprep.subr.mxu0 %v837
        %870 = vmatpush1.msra.mxu0 %v834
        %871 = vmatprep.subr.mxu0 0.0
        %872 = vmatpush2.msra.mxu0 0.0
        %873 = vmatprep.subr.mxu0 0.0
        %874 = vmatpush2.msra.mxu0 0.0
        %875 = vmatprep.subr.mxu0 0.0
        %876 = vmatpush2.msra.mxu0 0.0
        %877 = vmatprep.subr.mxu0 0.0
        %878 = vmatpush2.msra.mxu0 0.0
        %879 = vmatprep.subr.mxu0 0.0
        %880 = vmatpush2.msra.mxu0 0.0
        %881 = vmatprep.subr.mxu0 0.0
        %882 = vmatpush2.msra.mxu0 0.0
        %883 = vmatprep.subr.mxu0 0.0
        %884 = vmatpush2.msra.mxu0 0.0
        %885 = vmatprep.subr.mxu0 0.0
        %886 = vmatpush2.msra.mxu0 0.0
        %887 = vmatprep.subr.mxu0 0.0
        %888 = vmatpush2.msra.mxu0 0.0
        %889 = vmatprep.subr.mxu0 0.0
        %890 = vmatpush2.msra.mxu0 0.0
        %891 = vmatprep.subr.mxu0 0.0
        %892 = vmatpush2.msra.mxu0 0.0
        %893 = vmatprep.subr.mxu0 0.0
        %894 = vmatpush2.msra.mxu0 0.0
        %895 = vmatprep.subr.mxu0 0.0
        %896 = vmatpush2.msra.mxu0 0.0
        %897 = vmatprep.subr.mxu0 0.0
        %898 = vmatpush2.msra.mxu0 0.0
        %899 = vmatprep.subr.mxu0 0.0
        %900 = vmatpush2.msra.mxu0 0.0
        %901 = vmatprep.subr.mxu0 0.0
        %902 = vmatpush2.msra.mxu0 0.0
        %903 = vmatprep.mubr.f32.mxu0 0.0
        %904 = vmatmul.mubr.f32.gmra.mxu0 %v831
        %v905 = vpop.f32.mrf.mxu0
        %v906 = vadd.f32 0.0, %v905
        %v907 = vpop.f32.mrf.mxu0
        %v908 = vadd.f32 0.0, %v907
        %909 = vdwg.mxu0
        %v910 = vadd.f32 %v813, %v906
        %v911 = vadd.f32 %v814, %v908
        %912 = vrot.lane.b32.xlu0 %v311, 96
        %v913 = vpop.permute.xlu0 %912
        %914 = vrot.lane.b32.xlu0 %v349, 96
        %v915 = vpop.permute.xlu0 %914
        %916 = vrot.lane.b32.xlu0 %v312, 96
        %v917 = vpop.permute.xlu0 %916
        %vm918 = vcmask 785408
        %v919 = vsel %vm918, %v913, %v915
        %v920 = vsel %vm918, %v915, %v917
        %v923 = vsel %vm346, %v919, 0.0
        %v924 = vsel %vm347, %v920, 0.0
        %s925 = scalar_lea.vmem %s1, 48
        %v926 = vld [vmem:[%s925] sm:$0xff]
        %v928 = vsel %vm366, %v926, 0
        %v931 = vsel %vm370, %v923, 0
        %v934 = vsel %vm370, %v924, 0
        %936 = vmatprep.subr.mxu0 0.0
        %937 = vmatpush1.msra.mxu0 0.0
        %938 = vmatprep.subr.mxu0 0.0
        %939 = vmatpush1.msra.mxu0 0.0
        %940 = vmatprep.subr.mxu0 0.0
        %941 = vmatpush1.msra.mxu0 0.0
        %942 = vmatprep.subr.mxu0 0.0
        %943 = vmatpush1.msra.mxu0 0.0
        %944 = vmatprep.subr.mxu0 0.0
        %945 = vmatpush1.msra.mxu0 0.0
        %946 = vmatprep.subr.mxu0 0.0
        %947 = vmatpush1.msra.mxu0 0.0
        %948 = vmatprep.subr.mxu0 0.0
        %949 = vmatpush1.msra.mxu0 0.0
        %950 = vmatprep.subr.mxu0 0.0
        %951 = vmatpush1.msra.mxu0 0.0
        %952 = vmatprep.subr.mxu0 0.0
        %953 = vmatpush1.msra.mxu0 0.0
        %954 = vmatprep.subr.mxu0 0.0
        %955 = vmatpush1.msra.mxu0 0.0
        %956 = vmatprep.subr.mxu0 0.0
        %957 = vmatpush1.msra.mxu0 0.0
        %958 = vmatprep.subr.mxu0 0.0
        %959 = vmatpush1.msra.mxu0 0.0
        %960 = vmatprep.subr.mxu0 0.0
        %961 = vmatpush1.msra.mxu0 0.0
        %962 = vmatprep.subr.mxu0 0.0
        %963 = vmatpush1.msra.mxu0 0.0
        %964 = vmatprep.subr.mxu0 0.0
        %965 = vmatpush1.msra.mxu0 0.0
        %966 = vmatprep.subr.mxu0 %v934
        %967 = vmatpush1.msra.mxu0 %v931
        %968 = vmatprep.subr.mxu0 0.0
        %969 = vmatpush2.msra.mxu0 0.0
        %970 = vmatprep.subr.mxu0 0.0
        %971 = vmatpush2.msra.mxu0 0.0
        %972 = vmatprep.subr.mxu0 0.0
        %973 = vmatpush2.msra.mxu0 0.0
        %974 = vmatprep.subr.mxu0 0.0
        %975 = vmatpush2.msra.mxu0 0.0
        %976 = vmatprep.subr.mxu0 0.0
        %977 = vmatpush2.msra.mxu0 0.0
        %978 = vmatprep.subr.mxu0 0.0
        %979 = vmatpush2.msra.mxu0 0.0
        %980 = vmatprep.subr.mxu0 0.0
        %981 = vmatpush2.msra.mxu0 0.0
        %982 = vmatprep.subr.mxu0 0.0
        %983 = vmatpush2.msra.mxu0 0.0
        %984 = vmatprep.subr.mxu0 0.0
        %985 = vmatpush2.msra.mxu0 0.0
        %986 = vmatprep.subr.mxu0 0.0
        %987 = vmatpush2.msra.mxu0 0.0
        %988 = vmatprep.subr.mxu0 0.0
        %989 = vmatpush2.msra.mxu0 0.0
        %990 = vmatprep.subr.mxu0 0.0
        %991 = vmatpush2.msra.mxu0 0.0
        %992 = vmatprep.subr.mxu0 0.0
        %993 = vmatpush2.msra.mxu0 0.0
        %994 = vmatprep.subr.mxu0 0.0
        %995 = vmatpush2.msra.mxu0 0.0
        %996 = vmatprep.subr.mxu0 0.0
        %997 = vmatpush2.msra.mxu0 0.0
        %998 = vmatprep.subr.mxu0 0.0
        %999 = vmatpush2.msra.mxu0 0.0
        %1000 = vmatprep.mubr.f32.mxu0 0.0
        %1001 = vmatmul.mubr.f32.gmra.mxu0 %v928
        %v1002 = vpop.f32.mrf.mxu0
        %v1003 = vadd.f32 0.0, %v1002
        %v1004 = vpop.f32.mrf.mxu0
        %v1005 = vadd.f32 0.0, %v1004
        %1006 = vdwg.mxu0
        %v1007 = vadd.f32 %v910, %v1003
        %v1008 = vadd.f32 %v911, %v1005
        %s1009 = scalar_lea.vmem %s1, 56
        %v1010 = vld [vmem:[%s1009] sm:$0xff]
        %1011 = vrot.lane.b32.xlu0 %v311, 95
        %v1012 = vpop.permute.xlu0 %1011
        %1013 = vrot.lane.b32.xlu0 %v349, 95
        %v1014 = vpop.permute.xlu0 %1013
        %1015 = vrot.lane.b32.xlu0 %v312, 95
        %v1016 = vpop.permute.xlu0 %1015
        %vm1017 = vcmask 777216
        %v1018 = vsel %vm1017, %v1012, %v1014
        %v1019 = vsel %vm1017, %v1014, %v1016
        %v1021 = vsel %vm366, %v1010, 0
        %v1023 = vsel %vm370, %v1018, 0
        %v1025 = vsel %vm370, %v1019, 0
        %1027 = vmatprep.subr.mxu0 0.0
        %1028 = vmatpush1.msra.mxu0 0.0
        %1029 = vmatprep.subr.mxu0 0.0
        %1030 = vmatpush1.msra.mxu0 0.0
        %1031 = vmatprep.subr.mxu0 0.0
        %1032 = vmatpush1.msra.mxu0 0.0
        %1033 = vmatprep.subr.mxu0 0.0
        %1034 = vmatpush1.msra.mxu0 0.0
        %1035 = vmatprep.subr.mxu0 0.0
        %1036 = vmatpush1.msra.mxu0 0.0
        %1037 = vmatprep.subr.mxu0 0.0
        %1038 = vmatpush1.msra.mxu0 0.0
        %1039 = vmatprep.subr.mxu0 0.0
        %1040 = vmatpush1.msra.mxu0 0.0
        %1041 = vmatprep.subr.mxu0 0.0
        %1042 = vmatpush1.msra.mxu0 0.0
        %1043 = vmatprep.subr.mxu0 0.0
        %1044 = vmatpush1.msra.mxu0 0.0
        %1045 = vmatprep.subr.mxu0 0.0
        %1046 = vmatpush1.msra.mxu0 0.0
        %1047 = vmatprep.subr.mxu0 0.0
        %1048 = vmatpush1.msra.mxu0 0.0
        %1049 = vmatprep.subr.mxu0 0.0
        %1050 = vmatpush1.msra.mxu0 0.0
        %1051 = vmatprep.subr.mxu0 0.0
        %1052 = vmatpush1.msra.mxu0 0.0
        %1053 = vmatprep.subr.mxu0 0.0
        %1054 = vmatpush1.msra.mxu0 0.0
        %1055 = vmatprep.subr.mxu0 0.0
        %1056 = vmatpush1.msra.mxu0 0.0
        %1057 = vmatprep.subr.mxu0 %v1025
        %1058 = vmatpush1.msra.mxu0 %v1023
        %1059 = vmatprep.subr.mxu0 0.0
        %1060 = vmatpush2.msra.mxu0 0.0
        %1061 = vmatprep.subr.mxu0 0.0
        %1062 = vmatpush2.msra.mxu0 0.0
        %1063 = vmatprep.subr.mxu0 0.0
        %1064 = vmatpush2.msra.mxu0 0.0
        %1065 = vmatprep.subr.mxu0 0.0
        %1066 = vmatpush2.msra.mxu0 0.0
        %1067 = vmatprep.subr.mxu0 0.0
        %1068 = vmatpush2.msra.mxu0 0.0
        %1069 = vmatprep.subr.mxu0 0.0
        %1070 = vmatpush2.msra.mxu0 0.0
        %1071 = vmatprep.subr.mxu0 0.0
        %1072 = vmatpush2.msra.mxu0 0.0
        %1073 = vmatprep.subr.mxu0 0.0
        %1074 = vmatpush2.msra.mxu0 0.0
        %1075 = vmatprep.subr.mxu0 0.0
        %1076 = vmatpush2.msra.mxu0 0.0
        %1077 = vmatprep.subr.mxu0 0.0
        %1078 = vmatpush2.msra.mxu0 0.0
        %1079 = vmatprep.subr.mxu0 0.0
        %1080 = vmatpush2.msra.mxu0 0.0
        %1081 = vmatprep.subr.mxu0 0.0
        %1082 = vmatpush2.msra.mxu0 0.0
        %1083 = vmatprep.subr.mxu0 0.0
        %1084 = vmatpush2.msra.mxu0 0.0
        %1085 = vmatprep.subr.mxu0 0.0
        %1086 = vmatpush2.msra.mxu0 0.0
        %1087 = vmatprep.subr.mxu0 0.0
        %1088 = vmatpush2.msra.mxu0 0.0
        %1089 = vmatprep.subr.mxu0 0.0
        %1090 = vmatpush2.msra.mxu0 0.0
        %1091 = vmatprep.mubr.f32.mxu0 0.0
        %1092 = vmatmul.mubr.f32.gmra.mxu0 %v1021
        %v1093 = vpop.f32.mrf.mxu0
        %v1094 = vadd.f32 0.0, %v1093
        %v1095 = vpop.f32.mrf.mxu0
        %v1096 = vadd.f32 0.0, %v1095
        %1097 = vdwg.mxu0
        %v1098 = vadd.f32 %v1007, %v1094
        %v1099 = vadd.f32 %v1008, %v1096
        %1100 = vrot.lane.b32.xlu0 %v311, 94
        %v1101 = vpop.permute.xlu0 %1100
        %1102 = vrot.lane.b32.xlu0 %v349, 94
        %v1103 = vpop.permute.xlu0 %1102
        %1104 = vrot.lane.b32.xlu0 %v312, 94
        %v1105 = vpop.permute.xlu0 %1104
        %vm1106 = vcmask 769024
        %v1107 = vsel %vm1106, %v1101, %v1103
        %v1108 = vsel %vm1106, %v1103, %v1105
        %v1111 = vsel %vm528, %v1107, 0.0
        %v1112 = vsel %vm529, %v1108, 0.0
        %s1113 = scalar_lea.vmem %s1, 64
        %v1114 = vld [vmem:[%s1113] sm:$0xff]
        %v1116 = vsel %vm366, %v1114, 0
        %v1119 = vsel %vm370, %v1111, 0
        %v1122 = vsel %vm370, %v1112, 0
        %1124 = vmatprep.subr.mxu0 0.0
        %1125 = vmatpush1.msra.mxu0 0.0
        %1126 = vmatprep.subr.mxu0 0.0
        %1127 = vmatpush1.msra.mxu0 0.0
        %1128 = vmatprep.subr.mxu0 0.0
        %1129 = vmatpush1.msra.mxu0 0.0
        %1130 = vmatprep.subr.mxu0 0.0
        %1131 = vmatpush1.msra.mxu0 0.0
        %1132 = vmatprep.subr.mxu0 0.0
        %1133 = vmatpush1.msra.mxu0 0.0
        %1134 = vmatprep.subr.mxu0 0.0
        %1135 = vmatpush1.msra.mxu0 0.0
        %1136 = vmatprep.subr.mxu0 0.0
        %1137 = vmatpush1.msra.mxu0 0.0
        %1138 = vmatprep.subr.mxu0 0.0
        %1139 = vmatpush1.msra.mxu0 0.0
        %1140 = vmatprep.subr.mxu0 0.0
        %1141 = vmatpush1.msra.mxu0 0.0
        %1142 = vmatprep.subr.mxu0 0.0
        %1143 = vmatpush1.msra.mxu0 0.0
        %1144 = vmatprep.subr.mxu0 0.0
        %1145 = vmatpush1.msra.mxu0 0.0
        %1146 = vmatprep.subr.mxu0 0.0
        %1147 = vmatpush1.msra.mxu0 0.0
        %1148 = vmatprep.subr.mxu0 0.0
        %1149 = vmatpush1.msra.mxu0 0.0
        %1150 = vmatprep.subr.mxu0 0.0
        %1151 = vmatpush1.msra.mxu0 0.0
        %1152 = vmatprep.subr.mxu0 0.0
        %1153 = vmatpush1.msra.mxu0 0.0
        %1154 = vmatprep.subr.mxu0 %v1122
        %1155 = vmatpush1.msra.mxu0 %v1119
        %1156 = vmatprep.subr.mxu0 0.0
        %1157 = vmatpush2.msra.mxu0 0.0
        %1158 = vmatprep.subr.mxu0 0.0
        %1159 = vmatpush2.msra.mxu0 0.0
        %1160 = vmatprep.subr.mxu0 0.0
        %1161 = vmatpush2.msra.mxu0 0.0
        %1162 = vmatprep.subr.mxu0 0.0
        %1163 = vmatpush2.msra.mxu0 0.0
        %1164 = vmatprep.subr.mxu0 0.0
        %1165 = vmatpush2.msra.mxu0 0.0
        %1166 = vmatprep.subr.mxu0 0.0
        %1167 = vmatpush2.msra.mxu0 0.0
        %1168 = vmatprep.subr.mxu0 0.0
        %1169 = vmatpush2.msra.mxu0 0.0
        %1170 = vmatprep.subr.mxu0 0.0
        %1171 = vmatpush2.msra.mxu0 0.0
        %1172 = vmatprep.subr.mxu0 0.0
        %1173 = vmatpush2.msra.mxu0 0.0
        %1174 = vmatprep.subr.mxu0 0.0
        %1175 = vmatpush2.msra.mxu0 0.0
        %1176 = vmatprep.subr.mxu0 0.0
        %1177 = vmatpush2.msra.mxu0 0.0
        %1178 = vmatprep.subr.mxu0 0.0
        %1179 = vmatpush2.msra.mxu0 0.0
        %1180 = vmatprep.subr.mxu0 0.0
        %1181 = vmatpush2.msra.mxu0 0.0
        %1182 = vmatprep.subr.mxu0 0.0
        %1183 = vmatpush2.msra.mxu0 0.0
        %1184 = vmatprep.subr.mxu0 0.0
        %1185 = vmatpush2.msra.mxu0 0.0
        %1186 = vmatprep.subr.mxu0 0.0
        %1187 = vmatpush2.msra.mxu0 0.0
        %1188 = vmatprep.mubr.f32.mxu0 0.0
        %1189 = vmatmul.mubr.f32.gmra.mxu0 %v1116
        %v1190 = vpop.f32.mrf.mxu0
        %v1191 = vadd.f32 0.0, %v1190
        %v1192 = vpop.f32.mrf.mxu0
        %v1193 = vadd.f32 0.0, %v1192
        %1194 = vdwg.mxu0
        %v1195 = vadd.f32 %v1098, %v1191
        %v1196 = vadd.f32 %v1099, %v1193
        %v1197 = vld [vmem:[%s2] sm:$0xff]
        %1199 = vset.pattern.permute.xlu0 0
        %1200 = vperm.xlu0 %1199, %v1197
        %v1201 = vpop.permute.xlu0 %1200
        %v1203 = vadd.f32 %v1195, %v1201
        %v1204 = vadd.f32 %v1196, %v1201
        %v1205 = vadd.f32 %v1203, %v1204
        %1206 = vadd.xlane.f32.xlu0 %v1205
        %v1207 = vpop.xlane.xlu0 %1206
        %v1208 = vadd.f32 %v1207, 0.0
        %v1209 = vrcp.pop 256.0
        %v1210 = vmul.f32 %v1208, %v1209
        %v1211 = vsub.f32 %v1203, %v1210
        %v1212 = vsub.f32 %v1204, %v1210
        %v1213 = vmul.f32 %v1211, %v1211
        %v1214 = vmul.f32 %v1212, %v1212
        %v1215 = vadd.f32 %v1213, %v1214
        %1216 = vadd.xlane.f32.xlu0 %v1215
        %v1217 = vpop.xlane.xlu0 %1216
        %v1218 = vadd.f32 %v1217, 0.0
        %v1219 = vmul.f32 %v1218, %v1209
        %v1220 = vadd.f32 %v1219, 1e-05
        %v1221 = vrsqrt.pop %v1220
        %v1222 = vmul.f32 %v1211, %v1221
        %v1223 = vmul.f32 %v1212, %v1221
        %v1224 = vld [vmem:[%s3] sm:$0xff]
        %1226 = vset.pattern.permute.xlu0 0
        %1227 = vperm.xlu0 %1226, %v1224
        %v1228 = vpop.permute.xlu0 %1227
        %v1230 = vmul.f32 %v1222, %v1228
        %v1231 = vmul.f32 %v1223, %v1228
        %v1232 = vld [vmem:[%s4] sm:$0xff]
        %1234 = vset.pattern.permute.xlu0 0
        %1235 = vperm.xlu0 %1234, %v1232
        %v1236 = vpop.permute.xlu0 %1235
        %v1238 = vadd.f32 %v1230, %v1236
        %v1239 = vadd.f32 %v1231, %v1236
        %v1240 = vld [vmem:[%s306] sm:$0xff]
        %v1241 = vadd.f32 %v1240, 1.0
        %1243 = vset.pattern.permute.xlu0 0
        %1244 = vperm.xlu0 %1243, %v1241
        %v1245 = vpop.permute.xlu0 %1244
        %v1247 = vmul.f32 %v1238, %v1245
        %v1248 = vmul.f32 %v1239, %v1245
        %v1249 = vld [vmem:[%s310] sm:$0xff]
        %1251 = vset.pattern.permute.xlu0 0
        %1252 = vperm.xlu0 %1251, %v1249
        %v1253 = vpop.permute.xlu0 %1252
        %v1255 = vadd.f32 %v1247, %v1253
        %v1256 = vadd.f32 %v1248, %v1253
        %v1257 = vxor.u32 %v1255, 2147483648
        %v1258 = vxor.u32 %v1256, 2147483648
        %v1259 = vmul.f32 %v1257, 1.442695
        %v1260 = vpow.pop %v1259
        %v1261 = vmul.f32 %v1258, 1.442695
        %v1262 = vpow.pop %v1261
        %v1263 = vadd.f32 %v1260, 1.0
        %v1264 = vadd.f32 %v1262, 1.0
        %v1265 = vrcp.pop %v1263
        %v1266 = vmul.f32 1.0, %v1265
        %v1267 = vrcp.pop %v1264
        %v1268 = vmul.f32 1.0, %v1267
        %v1269 = vmul.f32 %v1255, %v1266
        %v1270 = vmul.f32 %v1256, %v1268
        %1271 = vst [vmem:[%s297] sm:$0xff] %v1269
        %1272 = vst [vmem:[%s297 + $0x8] sm:$0xff] %v1270
        %s1273 = sand.u32 %s191, 1
        %s1274 = scalar_lea.sflag [#allocation3], %s1273
        %s1275 = sand.u32 %s191, 1
        %s1276 = smul.addr %s1275, 16
        %s1277 = scalar_lea.vmem [#allocation2], %s1276
        // Predicated region
        $region49: #{tpu_custom_call.1} parent=47 // pred_check
          %p1278 = pneg %p201
        $region50: #{tpu_custom_call.1} parent=47 // pred_check_branch
          %1280 = sbr.rel (%p1278) target = $region52
        $region51: #{tpu_custom_call.1} parent=47 // pred_region
          %s1282 = ssub.s32 256, 256
          %1283 = vsyncadd %s1274, %s1282
          %s1284 = smul.addr %s21, 2
          %s1285 = smul.addr %s1284, 128
          %s1286 = scalar_lea.hbm %s7, %s1285
          %s1288 = sshll.u32 %s1277, 4
          %s1289 = int_to_ptr.vmem [resolvable:$true] %s1288
          %1291 = dma.vmem_to_hbm [thread:$0]  %s1289, 256, %s1286, %s1274
        $region52: #{tpu_custom_call.1} parent=47 // pred_fallthru
          _
      $region48: #{tpu_custom_call.1} parent=5 // pred_fallthru
        _
      %p1292 = scmp.le.s32.totalorder 2, %s16
      // Predicated region
      $region53: #{tpu_custom_call.1} parent=5 // pred_check
        %p1293 = pneg %p1292
      $region54: #{tpu_custom_call.1} parent=5 // pred_check_branch
        %1295 = sbr.rel (%p1293) target = $region56
      $region55: #{tpu_custom_call.1} parent=5 // pred_region
        %s1296 = ssub.s32 %s16, 2
        // Predicated region
        $region57: #{tpu_custom_call.1} parent=55 // pred_check
          %p1297 = pneg %p207
        $region58: #{tpu_custom_call.1} parent=55 // pred_check_branch
          %1299 = sbr.rel (%p1297) target = $region60
        $region59: #{tpu_custom_call.1} parent=55 // pred_region
          %s1300 = sand.u32 %s192, 1
          %s1301 = scalar_lea.sflag [#allocation3], %s1300
          %s1302 = sand.u32 %s192, 1
          %s1303 = smul.addr %s1302, 16
          %s1304 = scalar_lea.vmem [#allocation2], %s1303
          %1305 = dma.done %s1301, 256
        $region60: #{tpu_custom_call.1} parent=55 // pred_fallthru
          _
      $region56: #{tpu_custom_call.1} parent=5 // pred_fallthru
        _
    $region6: #{tpu_custom_call.1} parent=1 // loop_footer
      %s20 = sadd.s32 1, %s16
    $region7: #{tpu_custom_call.1} parent=1 // loop_footer_branch
      %15 = sbr.rel target = $region3
    $region8: #{tpu_custom_call.1} parent=1 // loop_exit
      _
    %1306 = vsyncpa [#allocation3], 1
    %s1307 = scalar_lea.sflag [#allocation3], 1
    %1308 = vsyncpa %s1307, 1

</llo_original>
